<compile_context>
chip_gen: v7x
topology: tpu7x:2x2x1
jax: 0.10.0
libtpu: 0.0.40
codegen_flags: <defaults>
</compile_context>

<pallas_src>
import functools

import jax
import jax.numpy as jnp
from jax.experimental import pallas as pl
from jax.experimental.pallas import tpu as pltpu

KSIZE = 7
PAD = (KSIZE - 1) // 2


def cbam_kernel(x_ref, w1t_ref, w2t_ref, ksa_ref, o_ref, *, hw_true):
    # x_ref: (Nb, C, HWp); w1t_ref: (C, Cr); w2t_ref: (Cr, C); ksa_ref: (2*HWp, HWp)
    x = x_ref[...].astype(jnp.float32)                    # (Nb, C, HWp)
    nb, c, hwp = x.shape

    if hwp != hw_true:
        # Lane padding present: mask pads out of the max reduction over HW.
        lane = jax.lax.broadcasted_iota(jnp.int32, (1, 1, hwp), 2)
        x_for_max = jnp.where(lane < hw_true, x, -jnp.inf)
    else:
        x_for_max = x

    # ---------------- Channel attention ----------------
    avg = jnp.sum(x, axis=2) * (1.0 / float(hw_true))     # (Nb, C) AdaptiveAvgPool2d(1)
    mx = jnp.max(x_for_max, axis=2)                       # (Nb, C) AdaptiveMaxPool2d(1)

    w1t = w1t_ref[...].astype(jnp.float32)                # (C, Cr)  fc1 weight (transposed)
    w2t = w2t_ref[...].astype(jnp.float32)                # (Cr, C)  fc2 weight (transposed)

    # One fc1 matmul on the stacked operand; fc2 is linear (bias-free Conv2d),
    # so fc2(relu(fc1(avg))) + fc2(relu(fc1(max))) == fc2(relu(fc1(avg)) + relu(fc1(max))).
    stacked = jnp.concatenate([avg, mx], axis=0)          # (2*Nb, C)
    h = jnp.maximum(
        jnp.dot(stacked, w1t, preferred_element_type=jnp.float32), 0.0)
    h = h[:nb] + h[nb:]                                   # (Nb, Cr)
    ca = jax.nn.sigmoid(
        jnp.dot(h, w2t, preferred_element_type=jnp.float32))   # (Nb, C)
    x_ca = x * ca[:, :, None]                             # (Nb, C, HWp)

    # ---------------- Spatial attention ----------------
    # Padded lane positions of x_ca are exactly 0 and hit all-zero rows of the
    # band matrix, so avg/max over channels need no extra masking here.
    avg_map = jnp.sum(x_ca, axis=1) * (1.0 / float(c))    # (Nb, HWp)
    max_map = jnp.max(x_ca, axis=1)                       # (Nb, HWp)
    cat = jnp.concatenate([avg_map, max_map], axis=1)     # (Nb, 2*HWp)

    k = ksa_ref[...].astype(jnp.float32)                  # (2*HWp, HWp) stacked band matrix
    sa = jax.nn.sigmoid(
        jnp.dot(cat, k, preferred_element_type=jnp.float32))    # (Nb, HWp)

    o_ref[...] = (x_ca * sa[:, None, :]).astype(o_ref.dtype)


def _spatial_conv_matrix(w_sa, h, w, hw_pad):
    """Fold the zero-padded 7x7 conv over the [avg, max] stack into a single
    (2*hw_pad, hw_pad) band matrix K so that
    conv2d([avg, max], w_sa) == [avg_flat | max_flat] @ K."""
    hw = h * w
    pos = jnp.arange(hw)
    row = pos // w
    col = pos % w
    # K[q, p]: contribution of input position q to output position p.
    di = row[:, None] - row[None, :] + PAD
    dj = col[:, None] - col[None, :] + PAD
    valid = (di >= 0) & (di < KSIZE) & (dj >= 0) & (dj < KSIZE)
    taps = w_sa[:, jnp.clip(di, 0, KSIZE - 1), jnp.clip(dj, 0, KSIZE - 1)]   # (2, HW, HW)
    k = jnp.where(valid[None], taps, 0.0).astype(jnp.float32)
    if hw_pad != hw:
        k = jnp.pad(k, ((0, 0), (0, hw_pad - hw), (0, hw_pad - hw)))
    return k.reshape(2 * hw_pad, hw_pad)                                     # (2*HWp, HWp)


def cbam(x, w1, w2, w_sa, *, block_n=None):
    """x: (N, C, H, W); w1: (C//r, C); w2: (C, C//r); w_sa: (2, 7, 7)."""
    N, C, H, W = x.shape
    HW = H * W
    Cr = w1.shape[0]
    HWp = ((HW + 127) // 128) * 128          # lane-dense padding to a multiple of 128

    # Lane-dense layout: H*W lands on the 128-lane axis.
    x_flat = x.reshape(N, C, HW)
    if HWp != HW:
        x_flat = jnp.pad(x_flat, ((0, 0), (0, 0), (0, HWp - HW)))

    w1t = jnp.asarray(w1, jnp.float32).T                 # (C, Cr)
    w2t = jnp.asarray(w2, jnp.float32).T                 # (Cr, C)
    k_sa = _spatial_conv_matrix(jnp.asarray(w_sa, jnp.float32), H, W, HWp)   # (2*HWp, HWp)

    ksa_bytes = 2 * HWp * HWp * 4
    assert ksa_bytes <= (8 << 20), (
        "band-matrix spatial conv is intended for small feature maps; "
        f"2*HW^2 f32 = {ksa_bytes} bytes exceeds the VMEM budget")
    # TODO(synk): for large HW, tile the (2*HW, HW) operator over output columns
    # with an extra grid axis, or switch to a 49-tap shifted-add conv via pltpu.roll.

    # block_n: ~2 MiB input tile. Per-step VMEM ~= 2*in + 2*out + f32 temps +
    # single-buffered constants, comfortably under v5e's 16 MiB default scope.
    if block_n is None:
        bytes_per_n = C * HWp * jnp.dtype(x.dtype).itemsize
        block_n = max(1, (2 << 20) // max(bytes_per_n, 1))
    block_n = max(1, min(int(block_n), N))

    # Only 2-TC parts (v7x) benefit from forcing >= 2 grid steps (megacore
    # sharding of the "parallel" batch axis); v5e/v6e keep the max tile.
    num_tc = 1
    try:
        if "v7" in jax.devices()[0].device_kind.lower():
            num_tc = 2
    except Exception:
        pass
    if num_tc > 1 and block_n >= N and N >= 2:
        block_n = (N + 1) // 2

    grid_n = pl.cdiv(N, block_n)
    N_pad = grid_n * block_n
    if N_pad != N:
        x_flat = jnp.pad(x_flat, ((0, N_pad - N), (0, 0), (0, 0)))

    cost = pl.CostEstimate(
        flops=int(4 * N_pad * HWp * HWp + 6 * N_pad * C * Cr + 8 * N_pad * C * HWp),
        transcendentals=int(N_pad * (C + HWp)),
        bytes_accessed=int(jnp.dtype(x.dtype).itemsize * 2 * N_pad * C * HWp
                           + 4 * (2 * HWp * HWp + 2 * C * Cr)),
    )

    kernel = functools.partial(cbam_kernel, hw_true=HW)

    def build_call(buffer_consts):
        const_kw = dict(pipeline_mode=pl.Buffered(1)) if buffer_consts else {}
        in_specs = [
            pl.BlockSpec((block_n, C, HWp), lambda n: (n, 0, 0)),
            pl.BlockSpec((C, Cr), lambda n: (0, 0), **const_kw),
            pl.BlockSpec((Cr, C), lambda n: (0, 0), **const_kw),
            pl.BlockSpec((2 * HWp, HWp), lambda n: (0, 0), **const_kw),
        ]
        return pl.pallas_call(
            kernel,
            out_shape=jax.ShapeDtypeStruct((N_pad, C, HWp), x.dtype),
            grid=(grid_n,),
            in_specs=in_specs,
            out_specs=pl.BlockSpec((block_n, C, HWp), lambda n: (n, 0, 0)),
            compiler_params=pltpu.CompilerParams(
                dimension_semantics=("parallel",)),
            cost_estimate=cost,
        )

    try:
        out_flat = jax.block_until_ready(build_call(True)(x_flat, w1t, w2t, k_sa))
    except Exception:
        # Fallback if single-buffered pipeline_mode is unsupported in this jax build.
        out_flat = jax.block_until_ready(build_call(False)(x_flat, w1t, w2t, k_sa))

    out_flat = out_flat[:N, :, :HW]
    return out_flat.reshape(N, C, H, W)


def cbam_ref(x, w1, w2, w_sa):
    """Pure-JAX reference mirroring the PyTorch forward (for validation)."""
    xf = x.astype(jnp.float32)
    avg = jnp.mean(xf, axis=(2, 3), keepdims=True)
    mx = jnp.max(xf, axis=(2, 3), keepdims=True)

    def mlp(v):  # v: (N, C, 1, 1)
        h = jnp.maximum(jnp.einsum('rc,nchw->nrhw', w1, v), 0.0)
        return jnp.einsum('cr,nrhw->nchw', w2, h)

    ca = jax.nn.sigmoid(mlp(avg) + mlp(mx))
    x_ca = xf * ca

    avg_map = jnp.mean(x_ca, axis=1, keepdims=True)
    max_map = jnp.max(x_ca, axis=1, keepdims=True)
    cat = jnp.concatenate([avg_map, max_map], axis=1)        # (N, 2, H, W)
    sa = jax.lax.conv_general_dilated(
        cat, w_sa.reshape(1, 2, KSIZE, KSIZE),
        window_strides=(1, 1), padding=((PAD, PAD), (PAD, PAD)),
        dimension_numbers=('NCHW', 'OIHW', 'NCHW'))
    sa = jax.nn.sigmoid(sa)
    return x_ca * sa


if __name__ == "__main__":
    N, C, H, W = 2, 32, 16, 16
    ratio = 16
    Cr = C // ratio  # = 2

    key = jax.random.PRNGKey(0)
    k1, k2, k3, k4 = jax.random.split(key, 4)
    x = jax.random.normal(k1, (N, C, H, W), jnp.float32)
    w1 = jax.random.normal(k2, (Cr, C), jnp.float32) * 0.1          # fc1 (1x1 conv) weight
    w2 = jax.random.normal(k3, (C, Cr), jnp.float32) * 0.1          # fc2 (1x1 conv) weight
    w_sa = jax.random.normal(k4, (2, KSIZE, KSIZE), jnp.float32) * 0.1  # spatial 7x7 conv weight

    out = jax.block_until_ready(cbam(x, w1, w2, w_sa))
    ref = cbam_ref(x, w1, w2, w_sa)
    assert out.shape == (N, C, H, W)
    assert jnp.allclose(out, ref, rtol=1e-3, atol=1e-3), "Pallas CBAM mismatch vs JAX reference"
    print("KERNEL_OK")
</pallas_src>

<mosaic_0001>
module attributes {stable_mosaic.version = 11 : i64} {
  func.func @cbam_kernel(%arg0: i32, %arg1: memref<2x32x256xf32, #tpu.memory_space<vmem>>, %arg2: memref<32x2xf32, #tpu.memory_space<vmem>>, %arg3: memref<2x32xf32, #tpu.memory_space<vmem>>, %arg4: memref<512x256xf32, #tpu.memory_space<vmem>>, %arg5: memref<2x32x256xf32, #tpu.memory_space<vmem>>) attributes {dimension_semantics = [#tpu.dimension_semantics<parallel>], iteration_bounds = array<i64: 1>, scalar_prefetch = 0 : i64, scratch_operands = 0 : i64, tpu.core_type = #tpu.core_type<tc>, window_params = [{transform_indices = @transform_0, window_bounds = array<i64: 2, 32, 256>}, {pipeline_mode = #tpu.pipeline_mode<synchronous>, transform_indices = @transform_1, window_bounds = array<i64: 32, 2>}, {pipeline_mode = #tpu.pipeline_mode<synchronous>, transform_indices = @transform_2, window_bounds = array<i64: 2, 32>}, {pipeline_mode = #tpu.pipeline_mode<synchronous>, transform_indices = @transform_3, window_bounds = array<i64: 512, 256>}, {transform_indices = @transform_4, window_bounds = array<i64: 2, 32, 256>}]} {
    %c0 = arith.constant 0 : index
    %c0_0 = arith.constant 0 : index
    %c0_1 = arith.constant 0 : index
    %0 = vector.load %arg1[%c0, %c0_0, %c0_1] : memref<2x32x256xf32, #tpu.memory_space<vmem>>, vector<2x32x256xf32>
    %cst = arith.constant dense<0.000000e+00> : vector<2x32xf32>
    %1 = vector.multi_reduction <add>, %0, %cst [2] : vector<2x32x256xf32> to vector<2x32xf32>
    %cst_2 = arith.constant 3.906250e-03 : f32
    %2 = vector.broadcast %cst_2 : f32 to vector<2x32xf32>
    %3 = arith.mulf %1, %2 : vector<2x32xf32>
    %cst_3 = arith.constant dense<0xFF800000> : vector<2x32xf32>
    %4 = vector.multi_reduction <maximumf>, %0, %cst_3 [2] : vector<2x32x256xf32> to vector<2x32xf32>
    %c0_4 = arith.constant 0 : index
    %c0_5 = arith.constant 0 : index
    %5 = vector.load %arg2[%c0_4, %c0_5] : memref<32x2xf32, #tpu.memory_space<vmem>>, vector<32x2xf32>
    %c0_6 = arith.constant 0 : index
    %c0_7 = arith.constant 0 : index
    %6 = vector.load %arg3[%c0_6, %c0_7] : memref<2x32xf32, #tpu.memory_space<vmem>>, vector<2x32xf32>
    %7 = tpu.concatenate %3, %4 in 0 : vector<2x32xf32>, vector<2x32xf32> -> vector<4x32xf32>
    %cst_8 = arith.constant dense<0.000000e+00> : vector<4x2xf32>
    %8 = tpu.matmul %7, %5, %cst_8 {dimension_numbers = #tpu.dot_dimension_numbers<[1], [0], [0], [1], [0, 0, 1, 1], [], []>} : vector<4x32xf32>, vector<32x2xf32>, vector<4x2xf32> -> vector<4x2xf32>
    %cst_9 = arith.constant 0.000000e+00 : f32
    %9 = vector.broadcast %cst_9 : f32 to vector<4x2xf32>
    %10 = arith.maximumf %8, %9 : vector<4x2xf32>
    %11 = vector.extract_strided_slice %10 {offsets = [0, 0], sizes = [2, 2], strides = [1, 1]} : vector<4x2xf32> to vector<2x2xf32>
    %12 = vector.extract_strided_slice %10 {offsets = [2, 0], sizes = [2, 2], strides = [1, 1]} : vector<4x2xf32> to vector<2x2xf32>
    %13 = arith.addf %11, %12 : vector<2x2xf32>
    %cst_10 = arith.constant dense<0.000000e+00> : vector<2x32xf32>
    %14 = tpu.matmul %13, %6, %cst_10 {dimension_numbers = #tpu.dot_dimension_numbers<[1], [0], [0], [1], [0, 0, 1, 1], [], []>} : vector<2x2xf32>, vector<2x32xf32>, vector<2x32xf32> -> vector<2x32xf32>
    %15 = arith.negf %14 : vector<2x32xf32>
    %16 = math.exp %15 : vector<2x32xf32>
    %cst_11 = arith.constant 1.000000e+00 : f32
    %17 = vector.broadcast %cst_11 : f32 to vector<2x32xf32>
    %18 = arith.addf %17, %16 : vector<2x32xf32>
    %19 = arith.divf %17, %18 : vector<2x32xf32>
    %20 = vector.shape_cast %19 : vector<2x32xf32> to vector<2x32x1xf32>
    %21 = vector.broadcast %20 : vector<2x32x1xf32> to vector<2x32x256xf32>
    %22 = arith.mulf %0, %21 : vector<2x32x256xf32>
    %cst_12 = arith.constant dense<0.000000e+00> : vector<2x256xf32>
    %23 = vector.multi_reduction <add>, %22, %cst_12 [1] : vector<2x32x256xf32> to vector<2x256xf32>
    %cst_13 = arith.constant 3.125000e-02 : f32
    %24 = vector.broadcast %cst_13 : f32 to vector<2x256xf32>
    %25 = arith.mulf %23, %24 : vector<2x256xf32>
    %cst_14 = arith.constant dense<0xFF800000> : vector<2x256xf32>
    %26 = vector.multi_reduction <maximumf>, %22, %cst_14 [1] : vector<2x32x256xf32> to vector<2x256xf32>
    %27 = tpu.concatenate %25, %26 in 1 : vector<2x256xf32>, vector<2x256xf32> -> vector<2x512xf32>
    %c0_15 = arith.constant 0 : index
    %c0_16 = arith.constant 0 : index
    %28 = vector.load %arg4[%c0_15, %c0_16] : memref<512x256xf32, #tpu.memory_space<vmem>>, vector<512x256xf32>
    %cst_17 = arith.constant dense<0.000000e+00> : vector<2x256xf32>
    %29 = tpu.matmul %27, %28, %cst_17 {dimension_numbers = #tpu.dot_dimension_numbers<[1], [0], [0], [1], [0, 0, 1, 1], [], []>} : vector<2x512xf32>, vector<512x256xf32>, vector<2x256xf32> -> vector<2x256xf32>
    %30 = arith.negf %29 : vector<2x256xf32>
    %31 = math.exp %30 : vector<2x256xf32>
    %cst_18 = arith.constant 1.000000e+00 : f32
    %32 = vector.broadcast %cst_18 : f32 to vector<2x256xf32>
    %33 = arith.addf %32, %31 : vector<2x256xf32>
    %34 = arith.divf %32, %33 : vector<2x256xf32>
    %35 = vector.shape_cast %34 : vector<2x256xf32> to vector<2x1x256xf32>
    %36 = vector.broadcast %35 : vector<2x1x256xf32> to vector<2x32x256xf32>
    %37 = arith.mulf %22, %36 : vector<2x32x256xf32>
    %c0_19 = arith.constant 0 : index
    %c0_20 = arith.constant 0 : index
    %c0_21 = arith.constant 0 : index
    %38 = vector.load %arg5[%c0_19, %c0_20, %c0_21] : memref<2x32x256xf32, #tpu.memory_space<vmem>>, vector<2x32x256xf32>
    tpu.vector_store %arg5[%c0_19, %c0_20, %c0_21], %37 {strides = array<i32>} : memref<2x32x256xf32, #tpu.memory_space<vmem>>, vector<2x32x256xf32>,
    return
  }
  func.func @transform_0(%arg0: i32) -> (i32, i32, i32) {
    %c0_i32 = arith.constant 0 : i32
    %c0_i32_0 = arith.constant 0 : i32
    %c0_i32_1 = arith.constant 0 : i32
    return %arg0, %c0_i32, %c0_i32_0 : i32, i32, i32
  }
  func.func @transform_1(%arg0: i32) -> (i32, i32) {
    %c0_i32 = arith.constant 0 : i32
    %c0_i32_0 = arith.constant 0 : i32
    %c0_i32_1 = arith.constant 0 : i32
    return %c0_i32, %c0_i32_0 : i32, i32
  }
  func.func @transform_2(%arg0: i32) -> (i32, i32) {
    %c0_i32 = arith.constant 0 : i32
    %c0_i32_0 = arith.constant 0 : i32
    %c0_i32_1 = arith.constant 0 : i32
    return %c0_i32, %c0_i32_0 : i32, i32
  }
  func.func @transform_3(%arg0: i32) -> (i32, i32) {
    %c0_i32 = arith.constant 0 : i32
    %c0_i32_0 = arith.constant 0 : i32
    %c0_i32_1 = arith.constant 0 : i32
    return %c0_i32, %c0_i32_0 : i32, i32
  }
  func.func @transform_4(%arg0: i32) -> (i32, i32, i32) {
    %c0_i32 = arith.constant 0 : i32
    %c0_i32_0 = arith.constant 0 : i32
    %c0_i32_1 = arith.constant 0 : i32
    return %arg0, %c0_i32, %c0_i32_0 : i32, i32, i32
  }
}

module attributes {stable_mosaic.version = 11 : i64} {
  func.func @cbam_kernel(%arg0: i32, %arg1: memref<2x32x256xf32, #tpu.memory_space<vmem>>, %arg2: memref<32x2xf32, #tpu.memory_space<vmem>>, %arg3: memref<2x32xf32, #tpu.memory_space<vmem>>, %arg4: memref<512x256xf32, #tpu.memory_space<vmem>>, %arg5: memref<2x32x256xf32, #tpu.memory_space<vmem>>) attributes {dimension_semantics = [#tpu.dimension_semantics<parallel>], iteration_bounds = array<i64: 1>, scalar_prefetch = 0 : i64, scratch_operands = 0 : i64, tpu.core_type = #tpu.core_type<tc>, window_params = [{transform_indices = @transform_0, window_bounds = array<i64: 2, 32, 256>}, {pipeline_mode = #tpu.pipeline_mode<synchronous>, transform_indices = @transform_1, window_bounds = array<i64: 32, 2>}, {pipeline_mode = #tpu.pipeline_mode<synchronous>, transform_indices = @transform_2, window_bounds = array<i64: 2, 32>}, {pipeline_mode = #tpu.pipeline_mode<synchronous>, transform_indices = @transform_3, window_bounds = array<i64: 512, 256>}, {transform_indices = @transform_4, window_bounds = array<i64: 2, 32, 256>}]} {
    %c0 = arith.constant 0 : index
    %c0_0 = arith.constant 0 : index
    %c0_1 = arith.constant 0 : index
    %0 = vector.load %arg1[%c0, %c0_0, %c0_1] : memref<2x32x256xf32, #tpu.memory_space<vmem>>, vector<2x32x256xf32>
    %cst = arith.constant dense<0.000000e+00> : vector<2x32xf32>
    %1 = vector.multi_reduction <add>, %0, %cst [2] : vector<2x32x256xf32> to vector<2x32xf32>
    %cst_2 = arith.constant 3.906250e-03 : f32
    %2 = vector.broadcast %cst_2 : f32 to vector<2x32xf32>
    %3 = arith.mulf %1, %2 : vector<2x32xf32>
    %cst_3 = arith.constant dense<0xFF800000> : vector<2x32xf32>
    %4 = vector.multi_reduction <maximumf>, %0, %cst_3 [2] : vector<2x32x256xf32> to vector<2x32xf32>
    %c0_4 = arith.constant 0 : index
    %c0_5 = arith.constant 0 : index
    %5 = vector.load %arg2[%c0_4, %c0_5] : memref<32x2xf32, #tpu.memory_space<vmem>>, vector<32x2xf32>
    %c0_6 = arith.constant 0 : index
    %c0_7 = arith.constant 0 : index
    %6 = vector.load %arg3[%c0_6, %c0_7] : memref<2x32xf32, #tpu.memory_space<vmem>>, vector<2x32xf32>
    %7 = tpu.concatenate %3, %4 in 0 : vector<2x32xf32>, vector<2x32xf32> -> vector<4x32xf32>
    %cst_8 = arith.constant dense<0.000000e+00> : vector<4x2xf32>
    %8 = tpu.matmul %7, %5, %cst_8 {dimension_numbers = #tpu.dot_dimension_numbers<[1], [0], [0], [1], [0, 0, 1, 1], [], []>} : vector<4x32xf32>, vector<32x2xf32>, vector<4x2xf32> -> vector<4x2xf32>
    %cst_9 = arith.constant 0.000000e+00 : f32
    %9 = vector.broadcast %cst_9 : f32 to vector<4x2xf32>
    %10 = arith.maximumf %8, %9 : vector<4x2xf32>
    %11 = vector.extract_strided_slice %10 {offsets = [0, 0], sizes = [2, 2], strides = [1, 1]} : vector<4x2xf32> to vector<2x2xf32>
    %12 = vector.extract_strided_slice %10 {offsets = [2, 0], sizes = [2, 2], strides = [1, 1]} : vector<4x2xf32> to vector<2x2xf32>
    %13 = arith.addf %11, %12 : vector<2x2xf32>
    %cst_10 = arith.constant dense<0.000000e+00> : vector<2x32xf32>
    %14 = tpu.matmul %13, %6, %cst_10 {dimension_numbers = #tpu.dot_dimension_numbers<[1], [0], [0], [1], [0, 0, 1, 1], [], []>} : vector<2x2xf32>, vector<2x32xf32>, vector<2x32xf32> -> vector<2x32xf32>
    %15 = arith.negf %14 : vector<2x32xf32>
    %16 = math.exp %15 : vector<2x32xf32>
    %cst_11 = arith.constant 1.000000e+00 : f32
    %17 = vector.broadcast %cst_11 : f32 to vector<2x32xf32>
    %18 = arith.addf %17, %16 : vector<2x32xf32>
    %19 = arith.divf %17, %18 : vector<2x32xf32>
    %20 = vector.shape_cast %19 : vector<2x32xf32> to vector<2x32x1xf32>
    %21 = vector.broadcast %20 : vector<2x32x1xf32> to vector<2x32x256xf32>
    %22 = arith.mulf %0, %21 : vector<2x32x256xf32>
    %cst_12 = arith.constant dense<0.000000e+00> : vector<2x256xf32>
    %23 = vector.multi_reduction <add>, %22, %cst_12 [1] : vector<2x32x256xf32> to vector<2x256xf32>
    %cst_13 = arith.constant 3.125000e-02 : f32
    %24 = vector.broadcast %cst_13 : f32 to vector<2x256xf32>
    %25 = arith.mulf %23, %24 : vector<2x256xf32>
    %cst_14 = arith.constant dense<0xFF800000> : vector<2x256xf32>
    %26 = vector.multi_reduction <maximumf>, %22, %cst_14 [1] : vector<2x32x256xf32> to vector<2x256xf32>
    %27 = tpu.concatenate %25, %26 in 1 : vector<2x256xf32>, vector<2x256xf32> -> vector<2x512xf32>
    %c0_15 = arith.constant 0 : index
    %c0_16 = arith.constant 0 : index
    %28 = vector.load %arg4[%c0_15, %c0_16] : memref<512x256xf32, #tpu.memory_space<vmem>>, vector<512x256xf32>
    %cst_17 = arith.constant dense<0.000000e+00> : vector<2x256xf32>
    %29 = tpu.matmul %27, %28, %cst_17 {dimension_numbers = #tpu.dot_dimension_numbers<[1], [0], [0], [1], [0, 0, 1, 1], [], []>} : vector<2x512xf32>, vector<512x256xf32>, vector<2x256xf32> -> vector<2x256xf32>
    %30 = arith.negf %29 : vector<2x256xf32>
    %31 = math.exp %30 : vector<2x256xf32>
    %cst_18 = arith.constant 1.000000e+00 : f32
    %32 = vector.broadcast %cst_18 : f32 to vector<2x256xf32>
    %33 = arith.addf %32, %31 : vector<2x256xf32>
    %34 = arith.divf %32, %33 : vector<2x256xf32>
    %35 = vector.shape_cast %34 : vector<2x256xf32> to vector<2x1x256xf32>
    %36 = vector.broadcast %35 : vector<2x1x256xf32> to vector<2x32x256xf32>
    %37 = arith.mulf %22, %36 : vector<2x32x256xf32>
    %c0_19 = arith.constant 0 : index
    %c0_20 = arith.constant 0 : index
    %c0_21 = arith.constant 0 : index
    %38 = vector.load %arg5[%c0_19, %c0_20, %c0_21] : memref<2x32x256xf32, #tpu.memory_space<vmem>>, vector<2x32x256xf32>
    tpu.vector_store %arg5[%c0_19, %c0_20, %c0_21], %37 {strides = array<i32>} : memref<2x32x256xf32, #tpu.memory_space<vmem>>, vector<2x32x256xf32>,
    return
  }
  func.func @transform_0(%arg0: i32) -> (i32, i32, i32) {
    %c0_i32 = arith.constant 0 : i32
    %c0_i32_0 = arith.constant 0 : i32
    %c0_i32_1 = arith.constant 0 : i32
    return %arg0, %c0_i32, %c0_i32_0 : i32, i32, i32
  }
  func.func @transform_1(%arg0: i32) -> (i32, i32) {
    %c0_i32 = arith.constant 0 : i32
    %c0_i32_0 = arith.constant 0 : i32
    %c0_i32_1 = arith.constant 0 : i32
    return %c0_i32, %c0_i32_0 : i32, i32
  }
  func.func @transform_2(%arg0: i32) -> (i32, i32) {
    %c0_i32 = arith.constant 0 : i32
    %c0_i32_0 = arith.constant 0 : i32
    %c0_i32_1 = arith.constant 0 : i32
    return %c0_i32, %c0_i32_0 : i32, i32
  }
  func.func @transform_3(%arg0: i32) -> (i32, i32) {
    %c0_i32 = arith.constant 0 : i32
    %c0_i32_0 = arith.constant 0 : i32
    %c0_i32_1 = arith.constant 0 : i32
    return %c0_i32, %c0_i32_0 : i32, i32
  }
  func.func @transform_4(%arg0: i32) -> (i32, i32, i32) {
    %c0_i32 = arith.constant 0 : i32
    %c0_i32_0 = arith.constant 0 : i32
    %c0_i32_1 = arith.constant 0 : i32
    return %arg0, %c0_i32, %c0_i32_0 : i32, i32, i32
  }
}

</mosaic_0001>

<llo_original>
// kernel: tpu_custom_call.1
$region0: #{tpu_custom_call.1}
  #allocation0 [shape = 'u32[]', space=smem, size = 0x4, offset = 0x4, fixed_abs, tag = 'smem constant byte address 0x4 - core index']
  #allocation1 [shape = 'u32[144,128]{1,0:T(1,128)}', space=vmem, size = 0x12000, scoped, tag = 'internal scratch']
  %s0 = inlined_call_operand.hbm [shape: f32[2,32,256], index: 0, kind: input, shape index: {}]
  %s1 = inlined_call_operand.vmem [shape: f32[32,2], index: 1, kind: input, shape index: {}]
  %s2 = inlined_call_operand.vmem [shape: f32[2,32], index: 2, kind: input, shape index: {}]
  %s3 = inlined_call_operand.hbm [shape: f32[512,256], index: 3, kind: input, shape index: {}]
  %s4 = inlined_call_operand.hbm [shape: f32[2,32,256], index: 4, kind: output, shape index: {}]
  %s5 = sld [smem:[#allocation0]]
  $region34: #{tpu_custom_call.1} parent=0
    _
  %s7 = ssub.s32 1, %s5
  %s8 = scalar_select 0, %s7, %s5
  $region1: #{tpu_custom_call.1} parent=0
    #allocation2 [shape = 'u8[65536]{0}', space=vmem, size = 0x10000, scoped, tag = 'input window, operand 0, single buffered']
    #allocation3 [shape = 's32[1]{0}', space=sflag, size = 0x4, scoped, tag = 'scoped memory for tpu_custom_call.1']
    #allocation4 [shape = 's32[1]{0}', space=sflag, size = 0x4, scoped, tag = 'scoped memory for tpu_custom_call.1']
    #allocation5 [shape = 'u8[524288]{0}', space=vmem, size = 0x80000, scoped, tag = 'input window, operand 3, single buffered']
    #allocation6 [shape = 's32[1]{0}', space=sflag, size = 0x4, scoped, tag = 'scoped memory for tpu_custom_call.1']
    #allocation7 [shape = 'u8[65536]{0}', space=vmem, size = 0x10000, scoped, tag = 'output window, operand 0, single buffered']
    %9 = vsyncpa [#allocation3], 0
    %10 = vsyncpa [#allocation6], 0
    %11 = vsyncpa [#allocation4], 0
    // Predicated region
    $region2: #{tpu_custom_call.1} parent=1 // pred_check
      _
    $region3: #{tpu_custom_call.1} parent=1 // pred_check_branch
      %13 = sbr.rel (0) target = $region5
    $region4: #{tpu_custom_call.1} parent=1 // pred_region
      %s15 = ssub.s32 2048, 2048
      %16 = vsyncadd [#allocation3], %s15
      %s17 = sshll.u32 [#allocation2], 4
      %s18 = int_to_ptr.vmem [resolvable:$true] %s17
      %23 = dma.hbm_to_vmem [thread:$0]  %s0, 2048, %s18, [#allocation3], 256, 256, 16
    $region5: #{tpu_custom_call.1} parent=1 // pred_fallthru
      _
    // Predicated region
    $region6: #{tpu_custom_call.1} parent=1 // pred_check
      _
    $region7: #{tpu_custom_call.1} parent=1 // pred_check_branch
      %25 = sbr.rel (0) target = $region9
    $region8: #{tpu_custom_call.1} parent=1 // pred_region
      _
    $region9: #{tpu_custom_call.1} parent=1 // pred_fallthru
      _
    // Predicated region
    $region10: #{tpu_custom_call.1} parent=1 // pred_check
      _
    $region11: #{tpu_custom_call.1} parent=1 // pred_check_branch
      %27 = sbr.rel (0) target = $region13
    $region12: #{tpu_custom_call.1} parent=1 // pred_region
      _
    $region13: #{tpu_custom_call.1} parent=1 // pred_fallthru
      _
    // Predicated region
    $region14: #{tpu_custom_call.1} parent=1 // pred_check
      _
    $region15: #{tpu_custom_call.1} parent=1 // pred_check_branch
      %29 = sbr.rel (0) target = $region17
    $region16: #{tpu_custom_call.1} parent=1 // pred_region
      %s31 = ssub.s32 16384, 16384
      %32 = vsyncadd [#allocation6], %s31
      %s33 = sshll.u32 [#allocation5], 4
      %s34 = int_to_ptr.vmem [resolvable:$true] %s33
      %39 = dma.hbm_to_vmem [thread:$0]  %s3, 16384, %s34, [#allocation6], 256, 256, 16
    $region17: #{tpu_custom_call.1} parent=1 // pred_fallthru
      _
    // Predicated region
    $region18: #{tpu_custom_call.1} parent=1 // pred_check
      _
    $region19: #{tpu_custom_call.1} parent=1 // pred_check_branch
      %41 = sbr.rel (0) target = $region21
    $region20: #{tpu_custom_call.1} parent=1 // pred_region
      %42 = dma.done [#allocation3], 2048
    $region21: #{tpu_custom_call.1} parent=1 // pred_fallthru
      _
    // Predicated region
    $region22: #{tpu_custom_call.1} parent=1 // pred_check
      _
    $region23: #{tpu_custom_call.1} parent=1 // pred_check_branch
      %44 = sbr.rel (0) target = $region25
    $region24: #{tpu_custom_call.1} parent=1 // pred_region
      %45 = dma.done [#allocation6], 16384
    $region25: #{tpu_custom_call.1} parent=1 // pred_fallthru
      _
    %v46 = vld [vmem:[#allocation2] sm:$0xff]
    %v47 = vld [vmem:[#allocation2 + $0x8] sm:$0xff]
    %v48 = vld [vmem:[#allocation2 + $0x10] sm:$0xff]
    %v49 = vld [vmem:[#allocation2 + $0x18] sm:$0xff]
    %v50 = vld [vmem:[#allocation2 + $0x20] sm:$0xff]
    %v51 = vld [vmem:[#allocation2 + $0x28] sm:$0xff]
    %v52 = vld [vmem:[#allocation2 + $0x30] sm:$0xff]
    %v53 = vld [vmem:[#allocation2 + $0x38] sm:$0xff]
    %v54 = vld [vmem:[#allocation2 + $0x40] sm:$0xff]
    %v55 = vld [vmem:[#allocation2 + $0x48] sm:$0xff]
    %v56 = vld [vmem:[#allocation2 + $0x50] sm:$0xff]
    %v57 = vld [vmem:[#allocation2 + $0x58] sm:$0xff]
    %v58 = vld [vmem:[#allocation2 + $0x60] sm:$0xff]
    %v59 = vld [vmem:[#allocation2 + $0x68] sm:$0xff]
    %v60 = vld [vmem:[#allocation2 + $0x70] sm:$0xff]
    %v61 = vld [vmem:[#allocation2 + $0x78] sm:$0xff]
    %v62 = vadd.f32 %v46, %v47
    %63 = vadd.xlane.f32.xlu0 %v62
    %v64 = vpop.xlane.xlu0 %63
    %v65 = vadd.f32 %v48, %v49
    %66 = vadd.xlane.f32.xlu0 %v65
    %v67 = vpop.xlane.xlu0 %66
    %v68 = vadd.f32 %v50, %v51
    %69 = vadd.xlane.f32.xlu0 %v68
    %v70 = vpop.xlane.xlu0 %69
    %v71 = vadd.f32 %v52, %v53
    %72 = vadd.xlane.f32.xlu0 %v71
    %v73 = vpop.xlane.xlu0 %72
    %v74 = vadd.f32 %v54, %v55
    %75 = vadd.xlane.f32.xlu0 %v74
    %v76 = vpop.xlane.xlu0 %75
    %v77 = vadd.f32 %v56, %v57
    %78 = vadd.xlane.f32.xlu0 %v77
    %v79 = vpop.xlane.xlu0 %78
    %v80 = vadd.f32 %v58, %v59
    %81 = vadd.xlane.f32.xlu0 %v80
    %v82 = vpop.xlane.xlu0 %81
    %v83 = vadd.f32 %v60, %v61
    %84 = vadd.xlane.f32.xlu0 %v83
    %v85 = vpop.xlane.xlu0 %84
    %v86 = vmul.f32 %v64, 0.00390625
    %v87 = vmul.f32 %v67, 0.00390625
    %v88 = vmul.f32 %v70, 0.00390625
    %v89 = vmul.f32 %v73, 0.00390625
    %v90 = vmul.f32 %v76, 0.00390625
    %v91 = vmul.f32 %v79, 0.00390625
    %v92 = vmul.f32 %v82, 0.00390625
    %v93 = vmul.f32 %v85, 0.00390625
    %v94 = vmax.f32 %v46, %v47
    %95 = vmax.xlane.f32.xlu0 %v94
    %v96 = vpop.xlane.xlu0 %95
    %v97 = vmax.f32 %v48, %v49
    %98 = vmax.xlane.f32.xlu0 %v97
    %v99 = vpop.xlane.xlu0 %98
    %v100 = vmax.f32 %v50, %v51
    %101 = vmax.xlane.f32.xlu0 %v100
    %v102 = vpop.xlane.xlu0 %101
    %v103 = vmax.f32 %v52, %v53
    %104 = vmax.xlane.f32.xlu0 %v103
    %v105 = vpop.xlane.xlu0 %104
    %v106 = vmax.f32 %v54, %v55
    %107 = vmax.xlane.f32.xlu0 %v106
    %v108 = vpop.xlane.xlu0 %107
    %v109 = vmax.f32 %v56, %v57
    %110 = vmax.xlane.f32.xlu0 %v109
    %v111 = vpop.xlane.xlu0 %110
    %v112 = vmax.f32 %v58, %v59
    %113 = vmax.xlane.f32.xlu0 %v112
    %v114 = vpop.xlane.xlu0 %113
    %v115 = vmax.f32 %v60, %v61
    %116 = vmax.xlane.f32.xlu0 %v115
    %v117 = vpop.xlane.xlu0 %116
    %v118 = vld [vmem:[%s1] sm:$0xff]
    %v119 = vld [vmem:[%s1 + $0x8] sm:$0xff]
    %v120 = vld [vmem:[%s1 + $0x10] sm:$0xff]
    %v121 = vld [vmem:[%s1 + $0x18] sm:$0xff]
    %v122 = vld [vmem:[%s2] sm:$0x3]
    %v131 = vlaneseq
    %v132 = vand.u32 %v131, 127
    %v133 = vlaneseq
    %v134 = vshrl.u32 %v133, 7
    %v135 = vsub.s32 %v132, %v134
    %v136 = vrot.slane %v86, %v135
    %v137 = vadd.s32 %v132, 4294967288
    %v138 = vlaneseq
    %v139 = vshrl.u32 %v138, 7
    %v140 = vsub.s32 %v137, %v139
    %v141 = vrot.slane %v87, %v140
    %vm142 = vcmask 130112
    %v143 = vsel %vm142, %v141, %v136
    %v144 = vadd.s32 %v132, 4294967280
    %v145 = vlaneseq
    %v146 = vshrl.u32 %v145, 7
    %v147 = vsub.s32 %v144, %v146
    %v148 = vrot.slane %v88, %v147
    %vm149 = vcmask 195712
    %v150 = vsel %vm149, %v148, %v143
    %v151 = vadd.s32 %v132, 4294967272
    %v152 = vlaneseq
    %v153 = vshrl.u32 %v152, 7
    %v154 = vsub.s32 %v151, %v153
    %v155 = vrot.slane %v89, %v154
    %vm156 = vcmask 261312
    %v157 = vsel %vm156, %v155, %v150
    %v158 = vlaneseq
    %v159 = vshrl.u32 %v158, 7
    %v160 = vsub.s32 %v132, %v159
    %v161 = vrot.slane %v90, %v160
    %v162 = vlaneseq
    %v163 = vshrl.u32 %v162, 7
    %v164 = vsub.s32 %v137, %v163
    %v165 = vrot.slane %v91, %v164
    %v166 = vsel %vm142, %v165, %v161
    %v167 = vlaneseq
    %v168 = vshrl.u32 %v167, 7
    %v169 = vsub.s32 %v144, %v168
    %v170 = vrot.slane %v92, %v169
    %v171 = vsel %vm149, %v170, %v166
    %v172 = vlaneseq
    %v173 = vshrl.u32 %v172, 7
    %v174 = vsub.s32 %v151, %v173
    %v175 = vrot.slane %v93, %v174
    %v176 = vsel %vm156, %v175, %v171
    %vm177 = vcmask 1041409
    %v178 = vsel %vm177, %v176, %v157
    %v188 = vlaneseq
    %v189 = vshrl.u32 %v188, 7
    %v190 = vsub.s32 %v132, %v189
    %v191 = vrot.slane %v96, %v190
    %v192 = vlaneseq
    %v193 = vshrl.u32 %v192, 7
    %v194 = vsub.s32 %v137, %v193
    %v195 = vrot.slane %v99, %v194
    %v196 = vsel %vm142, %v195, %v191
    %v197 = vlaneseq
    %v198 = vshrl.u32 %v197, 7
    %v199 = vsub.s32 %v144, %v198
    %v200 = vrot.slane %v102, %v199
    %v201 = vsel %vm149, %v200, %v196
    %v202 = vlaneseq
    %v203 = vshrl.u32 %v202, 7
    %v204 = vsub.s32 %v151, %v203
    %v205 = vrot.slane %v105, %v204
    %v206 = vsel %vm156, %v205, %v201
    %v207 = vlaneseq
    %v208 = vshrl.u32 %v207, 7
    %v209 = vsub.s32 %v132, %v208
    %v210 = vrot.slane %v108, %v209
    %v211 = vlaneseq
    %v212 = vshrl.u32 %v211, 7
    %v213 = vsub.s32 %v137, %v212
    %v214 = vrot.slane %v111, %v213
    %v215 = vsel %vm142, %v214, %v210
    %v216 = vlaneseq
    %v217 = vshrl.u32 %v216, 7
    %v218 = vsub.s32 %v144, %v217
    %v219 = vrot.slane %v114, %v218
    %v220 = vsel %vm149, %v219, %v215
    %v221 = vlaneseq
    %v222 = vshrl.u32 %v221, 7
    %v223 = vsub.s32 %v151, %v222
    %v224 = vrot.slane %v117, %v223
    %v225 = vsel %vm156, %v224, %v220
    %vm226 = vcmask 1043459
    %v227 = vsel %vm226, %v225, %v206
    %vm229 = vcmask 1041408
    %v230 = vsel %vm229, %v178, %v227
    %vm231 = vcmask 261120
    %v233 = vsel %vm231, %v230, 0
    %235 = vmatprep.subr.mxu0 0.0
    %236 = vmatpush1.msra.mxu0 %v118
    %237 = vmatprep.subr.mxu0 0.0
    %238 = vmatpush1.msra.mxu0 %v119
    %239 = vmatprep.subr.mxu0 0.0
    %240 = vmatpush1.msra.mxu0 %v120
    %241 = vmatprep.subr.mxu0 0.0
    %242 = vmatpush1.msra.mxu0 %v121
    %243 = vmatprep.subr.mxu0 0.0
    %244 = vmatpush1.msra.mxu0 0.0
    %245 = vmatprep.subr.mxu0 0.0
    %246 = vmatpush1.msra.mxu0 0.0
    %247 = vmatprep.subr.mxu0 0.0
    %248 = vmatpush1.msra.mxu0 0.0
    %249 = vmatprep.subr.mxu0 0.0
    %250 = vmatpush1.msra.mxu0 0.0
    %251 = vmatprep.subr.mxu0 0.0
    %252 = vmatpush1.msra.mxu0 0.0
    %253 = vmatprep.subr.mxu0 0.0
    %254 = vmatpush1.msra.mxu0 0.0
    %255 = vmatprep.subr.mxu0 0.0
    %256 = vmatpush1.msra.mxu0 0.0
    %257 = vmatprep.subr.mxu0 0.0
    %258 = vmatpush1.msra.mxu0 0.0
    %259 = vmatprep.subr.mxu0 0.0
    %260 = vmatpush1.msra.mxu0 0.0
    %261 = vmatprep.subr.mxu0 0.0
    %262 = vmatpush1.msra.mxu0 0.0
    %263 = vmatprep.subr.mxu0 0.0
    %264 = vmatpush1.msra.mxu0 0.0
    %265 = vmatprep.subr.mxu0 0.0
    %266 = vmatpush1.msra.mxu0 0.0
    %267 = vmatprep.subr.mxu0 0.0
    %268 = vmatpush1.msra.mxu0 0.0
    %269 = vmatprep.subr.mxu0 0.0
    %270 = vmatpush1.msra.mxu0 0.0
    %271 = vmatprep.subr.mxu0 0.0
    %272 = vmatpush1.msra.mxu0 0.0
    %273 = vmatprep.subr.mxu0 0.0
    %274 = vmatpush1.msra.mxu0 0.0
    %275 = vmatprep.subr.mxu0 0.0
    %276 = vmatpush1.msra.mxu0 0.0
    %277 = vmatprep.subr.mxu0 0.0
    %278 = vmatpush1.msra.mxu0 0.0
    %279 = vmatprep.subr.mxu0 0.0
    %280 = vmatpush1.msra.mxu0 0.0
    %281 = vmatprep.subr.mxu0 0.0
    %282 = vmatpush1.msra.mxu0 0.0
    %283 = vmatprep.subr.mxu0 0.0
    %284 = vmatpush1.msra.mxu0 0.0
    %285 = vmatprep.subr.mxu0 0.0
    %286 = vmatpush1.msra.mxu0 0.0
    %287 = vmatprep.subr.mxu0 0.0
    %288 = vmatpush1.msra.mxu0 0.0
    %289 = vmatprep.subr.mxu0 0.0
    %290 = vmatpush1.msra.mxu0 0.0
    %291 = vmatprep.subr.mxu0 0.0
    %292 = vmatpush1.msra.mxu0 0.0
    %293 = vmatprep.subr.mxu0 0.0
    %294 = vmatpush1.msra.mxu0 0.0
    %295 = vmatprep.subr.mxu0 0.0
    %296 = vmatpush1.msra.mxu0 0.0
    %297 = vmatprep.subr.mxu0 0.0
    %298 = vmatpush1.msra.mxu0 0.0
    %299 = vmatprep.mubr.f32.mxu0 0.0
    %300 = vmatmul.mubr.f32.gmra.mrb[0].mxu0 %v233
    %v301 = vpop.f32.mrb[0].mxu0
    %v302 = vadd.f32 0.0, %v301
    %v303 = vpop.f32.mrb[0].mxu0
    %304 = vdwg.mxu0
    %v305 = vmax.f32 %v302, 0.0
    %v307 = vrot.slane %v305, 2
    %v309 = vadd.f32 %v305, %v307
    %vm310 = vcmask 15360
    %v312 = vsel %vm310, %v309, 0
    %v315 = vsel %vm229, %v122, 0
    %317 = vmatprep.subr.mxu0 0.0
    %318 = vmatpush1.msra.mxu0 %v315
    %319 = vmatprep.subr.mxu0 0.0
    %320 = vmatpush1.msra.mxu0 0.0
    %321 = vmatprep.subr.mxu0 0.0
    %322 = vmatpush1.msra.mxu0 0.0
    %323 = vmatprep.subr.mxu0 0.0
    %324 = vmatpush1.msra.mxu0 0.0
    %325 = vmatprep.subr.mxu0 0.0
    %326 = vmatpush1.msra.mxu0 0.0
    %327 = vmatprep.subr.mxu0 0.0
    %328 = vmatpush1.msra.mxu0 0.0
    %329 = vmatprep.subr.mxu0 0.0
    %330 = vmatpush1.msra.mxu0 0.0
    %331 = vmatprep.subr.mxu0 0.0
    %332 = vmatpush1.msra.mxu0 0.0
    %333 = vmatprep.subr.mxu0 0.0
    %334 = vmatpush1.msra.mxu0 0.0
    %335 = vmatprep.subr.mxu0 0.0
    %336 = vmatpush1.msra.mxu0 0.0
    %337 = vmatprep.subr.mxu0 0.0
    %338 = vmatpush1.msra.mxu0 0.0
    %339 = vmatprep.subr.mxu0 0.0
    %340 = vmatpush1.msra.mxu0 0.0
    %341 = vmatprep.subr.mxu0 0.0
    %342 = vmatpush1.msra.mxu0 0.0
    %343 = vmatprep.subr.mxu0 0.0
    %344 = vmatpush1.msra.mxu0 0.0
    %345 = vmatprep.subr.mxu0 0.0
    %346 = vmatpush1.msra.mxu0 0.0
    %347 = vmatprep.subr.mxu0 0.0
    %348 = vmatpush1.msra.mxu0 0.0
    %349 = vmatprep.subr.mxu0 0.0
    %350 = vmatpush1.msra.mxu0 0.0
    %351 = vmatprep.subr.mxu0 0.0
    %352 = vmatpush1.msra.mxu0 0.0
    %353 = vmatprep.subr.mxu0 0.0
    %354 = vmatpush1.msra.mxu0 0.0
    %355 = vmatprep.subr.mxu0 0.0
    %356 = vmatpush1.msra.mxu0 0.0
    %357 = vmatprep.subr.mxu0 0.0
    %358 = vmatpush1.msra.mxu0 0.0
    %359 = vmatprep.subr.mxu0 0.0
    %360 = vmatpush1.msra.mxu0 0.0
    %361 = vmatprep.subr.mxu0 0.0
    %362 = vmatpush1.msra.mxu0 0.0
    %363 = vmatprep.subr.mxu0 0.0
    %364 = vmatpush1.msra.mxu0 0.0
    %365 = vmatprep.subr.mxu0 0.0
    %366 = vmatpush1.msra.mxu0 0.0
    %367 = vmatprep.subr.mxu0 0.0
    %368 = vmatpush1.msra.mxu0 0.0
    %369 = vmatprep.subr.mxu0 0.0
    %370 = vmatpush1.msra.mxu0 0.0
    %371 = vmatprep.subr.mxu0 0.0
    %372 = vmatpush1.msra.mxu0 0.0
    %373 = vmatprep.subr.mxu0 0.0
    %374 = vmatpush1.msra.mxu0 0.0
    %375 = vmatprep.subr.mxu0 0.0
    %376 = vmatpush1.msra.mxu0 0.0
    %377 = vmatprep.subr.mxu0 0.0
    %378 = vmatpush1.msra.mxu0 0.0
    %379 = vmatprep.subr.mxu0 0.0
    %380 = vmatpush1.msra.mxu0 0.0
    %381 = vmatprep.mubr.f32.mxu0 0.0
    %382 = vmatmul.mubr.f32.gmra.mrb[0].mxu0 %v312
    %v383 = vpop.f32.mrb[0].mxu0
    %v384 = vadd.f32 0.0, %v383
    %v385 = vpop.f32.mrb[0].mxu0
    %386 = vdwg.mxu0
    %v387 = vxor.u32 %v384, 2147483648
    %v388 = vmul.f32 %v387, 1.442695
    %v389 = vpow.pop %v388
    %v390 = vadd.f32 %v389, 1.0
    %v391 = vrcp.pop %v390
    %v392 = vmul.f32 1.0, %v391
    %v393 = vlaneseq
    %v394 = vshrl.u32 %v393, 7
    %v395 = vsub.s32 0, %v394
    %v396 = vrot.slane %v392, %v395
    %398 = vbcast.lane.b32.xlu0 %v396, 256
    %v399 = vpop.permute.xlu0 %398
    %s401 = sor.u32 256, 8
    %402 = vbcast.lane.b32.xlu0 %v396, %s401
    %v403 = vpop.permute.xlu0 %402
    %s405 = sor.u32 256, 16
    %406 = vbcast.lane.b32.xlu0 %v396, %s405
    %v407 = vpop.permute.xlu0 %406
    %s409 = sor.u32 256, 24
    %410 = vbcast.lane.b32.xlu0 %v396, %s409
    %v411 = vpop.permute.xlu0 %410
    %v412 = vlaneseq
    %v413 = vshrl.u32 %v412, 7
    %v414 = vsub.s32 1, %v413
    %v415 = vrot.slane %v392, %v414
    %417 = vbcast.lane.b32.xlu0 %v415, 256
    %v418 = vpop.permute.xlu0 %417
    %s420 = sor.u32 256, 8
    %421 = vbcast.lane.b32.xlu0 %v415, %s420
    %v422 = vpop.permute.xlu0 %421
    %s424 = sor.u32 256, 16
    %425 = vbcast.lane.b32.xlu0 %v415, %s424
    %v426 = vpop.permute.xlu0 %425
    %s428 = sor.u32 256, 24
    %429 = vbcast.lane.b32.xlu0 %v415, %s428
    %v430 = vpop.permute.xlu0 %429
    %v431 = vmul.f32 %v46, %v399
    %v432 = vmul.f32 %v47, %v399
    %v433 = vmul.f32 %v48, %v403
    %v434 = vmul.f32 %v49, %v403
    %v435 = vmul.f32 %v50, %v407
    %v436 = vmul.f32 %v51, %v407
    %v437 = vmul.f32 %v52, %v411
    %v438 = vmul.f32 %v53, %v411
    %v439 = vmul.f32 %v54, %v418
    %v440 = vmul.f32 %v55, %v418
    %v441 = vmul.f32 %v56, %v422
    %v442 = vmul.f32 %v57, %v422
    %v443 = vmul.f32 %v58, %v426
    %v444 = vmul.f32 %v59, %v426
    %v445 = vmul.f32 %v60, %v430
    %v446 = vmul.f32 %v61, %v430
    %v447 = vadd.f32 %v431, %v433
    %v448 = vadd.f32 %v447, %v435
    %v449 = vadd.f32 %v448, %v437
    %v450 = vrot.slane %v449, 4
    %v451 = vadd.f32 %v449, %v450
    %v452 = vrot.slane %v451, 2
    %v453 = vadd.f32 %v451, %v452
    %v454 = vrot.slane %v453, 1
    %v455 = vadd.f32 %v453, %v454
    %v456 = vadd.f32 %v432, %v434
    %v457 = vadd.f32 %v456, %v436
    %v458 = vadd.f32 %v457, %v438
    %v459 = vrot.slane %v458, 4
    %v460 = vadd.f32 %v458, %v459
    %v461 = vrot.slane %v460, 2
    %v462 = vadd.f32 %v460, %v461
    %v463 = vrot.slane %v462, 1
    %v464 = vadd.f32 %v462, %v463
    %v465 = vadd.f32 %v439, %v441
    %v466 = vadd.f32 %v465, %v443
    %v467 = vadd.f32 %v466, %v445
    %v468 = vrot.slane %v467, 4
    %v469 = vadd.f32 %v467, %v468
    %v470 = vrot.slane %v469, 2
    %v471 = vadd.f32 %v469, %v470
    %v472 = vrot.slane %v471, 1
    %v473 = vadd.f32 %v471, %v472
    %v474 = vadd.f32 %v440, %v442
    %v475 = vadd.f32 %v474, %v444
    %v476 = vadd.f32 %v475, %v446
    %v477 = vrot.slane %v476, 4
    %v478 = vadd.f32 %v476, %v477
    %v479 = vrot.slane %v478, 2
    %v480 = vadd.f32 %v478, %v479
    %v481 = vrot.slane %v480, 1
    %v482 = vadd.f32 %v480, %v481
    %v483 = vmul.f32 %v455, 0.03125
    %v484 = vmul.f32 %v464, 0.03125
    %v485 = vmul.f32 %v473, 0.03125
    %v486 = vmul.f32 %v482, 0.03125
    %v487 = vmax.f32 %v431, %v433
    %v488 = vmax.f32 %v487, %v435
    %v489 = vmax.f32 %v488, %v437
    %v490 = vrot.slane %v489, 4
    %v491 = vmax.f32 %v489, %v490
    %v492 = vrot.slane %v491, 2
    %v493 = vmax.f32 %v491, %v492
    %v494 = vrot.slane %v493, 1
    %v495 = vmax.f32 %v493, %v494
    %v496 = vmax.f32 %v432, %v434
    %v497 = vmax.f32 %v496, %v436
    %v498 = vmax.f32 %v497, %v438
    %v499 = vrot.slane %v498, 4
    %v500 = vmax.f32 %v498, %v499
    %v501 = vrot.slane %v500, 2
    %v502 = vmax.f32 %v500, %v501
    %v503 = vrot.slane %v502, 1
    %v504 = vmax.f32 %v502, %v503
    %v505 = vmax.f32 %v439, %v441
    %v506 = vmax.f32 %v505, %v443
    %v507 = vmax.f32 %v506, %v445
    %v508 = vrot.slane %v507, 4
    %v509 = vmax.f32 %v507, %v508
    %v510 = vrot.slane %v509, 2
    %v511 = vmax.f32 %v509, %v510
    %v512 = vrot.slane %v511, 1
    %v513 = vmax.f32 %v511, %v512
    %v514 = vmax.f32 %v440, %v442
    %v515 = vmax.f32 %v514, %v444
    %v516 = vmax.f32 %v515, %v446
    %v517 = vrot.slane %v516, 4
    %v518 = vmax.f32 %v516, %v517
    %v519 = vrot.slane %v518, 2
    %v520 = vmax.f32 %v518, %v519
    %v521 = vrot.slane %v520, 1
    %v522 = vmax.f32 %v520, %v521
    %v527 = vsel %vm177, %v485, %v483
    %v528 = vsel %vm177, %v486, %v484
    %v535 = vsel %vm177, %v513, %v495
    %v536 = vsel %vm177, %v522, %v504
    %v539 = vld [vmem:[#allocation5] sm:$0xff]
    %v540 = vld [vmem:[#allocation5 + $0x8] sm:$0xff]
    %v541 = vld [vmem:[#allocation5 + $0x10] sm:$0xff]
    %v542 = vld [vmem:[#allocation5 + $0x18] sm:$0xff]
    %v543 = vld [vmem:[#allocation5 + $0x20] sm:$0xff]
    %v544 = vld [vmem:[#allocation5 + $0x28] sm:$0xff]
    %v545 = vld [vmem:[#allocation5 + $0x30] sm:$0xff]
    %v546 = vld [vmem:[#allocation5 + $0x38] sm:$0xff]
    %v547 = vld [vmem:[#allocation5 + $0x40] sm:$0xff]
    %v548 = vld [vmem:[#allocation5 + $0x48] sm:$0xff]
    %v549 = vld [vmem:[#allocation5 + $0x50] sm:$0xff]
    %v550 = vld [vmem:[#allocation5 + $0x58] sm:$0xff]
    %v551 = vld [vmem:[#allocation5 + $0x60] sm:$0xff]
    %v552 = vld [vmem:[#allocation5 + $0x68] sm:$0xff]
    %v553 = vld [vmem:[#allocation5 + $0x70] sm:$0xff]
    %v554 = vld [vmem:[#allocation5 + $0x78] sm:$0xff]
    %v555 = vld [vmem:[#allocation5 + $0x80] sm:$0xff]
    %v556 = vld [vmem:[#allocation5 + $0x88] sm:$0xff]
    %v557 = vld [vmem:[#allocation5 + $0x90] sm:$0xff]
    %v558 = vld [vmem:[#allocation5 + $0x98] sm:$0xff]
    %v559 = vld [vmem:[#allocation5 + $0xa0] sm:$0xff]
    %v560 = vld [vmem:[#allocation5 + $0xa8] sm:$0xff]
    %v561 = vld [vmem:[#allocation5 + $0xb0] sm:$0xff]
    %v562 = vld [vmem:[#allocation5 + $0xb8] sm:$0xff]
    %v563 = vld [vmem:[#allocation5 + $0xc0] sm:$0xff]
    %v564 = vld [vmem:[#allocation5 + $0xc8] sm:$0xff]
    %v565 = vld [vmem:[#allocation5 + $0xd0] sm:$0xff]
    %v566 = vld [vmem:[#allocation5 + $0xd8] sm:$0xff]
    %v567 = vld [vmem:[#allocation5 + $0xe0] sm:$0xff]
    %v568 = vld [vmem:[#allocation5 + $0xe8] sm:$0xff]
    %v569 = vld [vmem:[#allocation5 + $0xf0] sm:$0xff]
    %v570 = vld [vmem:[#allocation5 + $0xf8] sm:$0xff]
    %v571 = vld [vmem:[#allocation5 + $0x100] sm:$0xff]
    %v572 = vld [vmem:[#allocation5 + $0x108] sm:$0xff]
    %v573 = vld [vmem:[#allocation5 + $0x110] sm:$0xff]
    %v574 = vld [vmem:[#allocation5 + $0x118] sm:$0xff]
    %v575 = vld [vmem:[#allocation5 + $0x120] sm:$0xff]
    %v576 = vld [vmem:[#allocation5 + $0x128] sm:$0xff]
    %v577 = vld [vmem:[#allocation5 + $0x130] sm:$0xff]
    %v578 = vld [vmem:[#allocation5 + $0x138] sm:$0xff]
    %v579 = vld [vmem:[#allocation5 + $0x140] sm:$0xff]
    %v580 = vld [vmem:[#allocation5 + $0x148] sm:$0xff]
    %v581 = vld [vmem:[#allocation5 + $0x150] sm:$0xff]
    %v582 = vld [vmem:[#allocation5 + $0x158] sm:$0xff]
    %v583 = vld [vmem:[#allocation5 + $0x160] sm:$0xff]
    %v584 = vld [vmem:[#allocation5 + $0x168] sm:$0xff]
    %v585 = vld [vmem:[#allocation5 + $0x170] sm:$0xff]
    %v586 = vld [vmem:[#allocation5 + $0x178] sm:$0xff]
    %v587 = vld [vmem:[#allocation5 + $0x180] sm:$0xff]
    %v588 = vld [vmem:[#allocation5 + $0x188] sm:$0xff]
    %v589 = vld [vmem:[#allocation5 + $0x190] sm:$0xff]
    %v590 = vld [vmem:[#allocation5 + $0x198] sm:$0xff]
    %v591 = vld [vmem:[#allocation5 + $0x1a0] sm:$0xff]
    %v592 = vld [vmem:[#allocation5 + $0x1a8] sm:$0xff]
    %v593 = vld [vmem:[#allocation5 + $0x1b0] sm:$0xff]
    %v594 = vld [vmem:[#allocation5 + $0x1b8] sm:$0xff]
    %v595 = vld [vmem:[#allocation5 + $0x1c0] sm:$0xff]
    %v596 = vld [vmem:[#allocation5 + $0x1c8] sm:$0xff]
    %v597 = vld [vmem:[#allocation5 + $0x1d0] sm:$0xff]
    %v598 = vld [vmem:[#allocation5 + $0x1d8] sm:$0xff]
    %v599 = vld [vmem:[#allocation5 + $0x1e0] sm:$0xff]
    %v600 = vld [vmem:[#allocation5 + $0x1e8] sm:$0xff]
    %v601 = vld [vmem:[#allocation5 + $0x1f0] sm:$0xff]
    %v602 = vld [vmem:[#allocation5 + $0x1f8] sm:$0xff]
    %v603 = vld [vmem:[#allocation5 + $0x200] sm:$0xff]
    %v604 = vld [vmem:[#allocation5 + $0x208] sm:$0xff]
    %v605 = vld [vmem:[#allocation5 + $0x210] sm:$0xff]
    %v606 = vld [vmem:[#allocation5 + $0x218] sm:$0xff]
    %v607 = vld [vmem:[#allocation5 + $0x220] sm:$0xff]
    %v608 = vld [vmem:[#allocation5 + $0x228] sm:$0xff]
    %v609 = vld [vmem:[#allocation5 + $0x230] sm:$0xff]
    %v610 = vld [vmem:[#allocation5 + $0x238] sm:$0xff]
    %v611 = vld [vmem:[#allocation5 + $0x240] sm:$0xff]
    %v612 = vld [vmem:[#allocation5 + $0x248] sm:$0xff]
    %v613 = vld [vmem:[#allocation5 + $0x250] sm:$0xff]
    %v614 = vld [vmem:[#allocation5 + $0x258] sm:$0xff]
    %v615 = vld [vmem:[#allocation5 + $0x260] sm:$0xff]
    %v616 = vld [vmem:[#allocation5 + $0x268] sm:$0xff]
    %v617 = vld [vmem:[#allocation5 + $0x270] sm:$0xff]
    %v618 = vld [vmem:[#allocation5 + $0x278] sm:$0xff]
    %v619 = vld [vmem:[#allocation5 + $0x280] sm:$0xff]
    %v620 = vld [vmem:[#allocation5 + $0x288] sm:$0xff]
    %v621 = vld [vmem:[#allocation5 + $0x290] sm:$0xff]
    %v622 = vld [vmem:[#allocation5 + $0x298] sm:$0xff]
    %v623 = vld [vmem:[#allocation5 + $0x2a0] sm:$0xff]
    %v624 = vld [vmem:[#allocation5 + $0x2a8] sm:$0xff]
    %v625 = vld [vmem:[#allocation5 + $0x2b0] sm:$0xff]
    %v626 = vld [vmem:[#allocation5 + $0x2b8] sm:$0xff]
    %v627 = vld [vmem:[#allocation5 + $0x2c0] sm:$0xff]
    %v628 = vld [vmem:[#allocation5 + $0x2c8] sm:$0xff]
    %v629 = vld [vmem:[#allocation5 + $0x2d0] sm:$0xff]
    %v630 = vld [vmem:[#allocation5 + $0x2d8] sm:$0xff]
    %v631 = vld [vmem:[#allocation5 + $0x2e0] sm:$0xff]
    %v632 = vld [vmem:[#allocation5 + $0x2e8] sm:$0xff]
    %v633 = vld [vmem:[#allocation5 + $0x2f0] sm:$0xff]
    %v634 = vld [vmem:[#allocation5 + $0x2f8] sm:$0xff]
    %v635 = vld [vmem:[#allocation5 + $0x300] sm:$0xff]
    %v636 = vld [vmem:[#allocation5 + $0x308] sm:$0xff]
    %v637 = vld [vmem:[#allocation5 + $0x310] sm:$0xff]
    %v638 = vld [vmem:[#allocation5 + $0x318] sm:$0xff]
    %v639 = vld [vmem:[#allocation5 + $0x320] sm:$0xff]
    %v640 = vld [vmem:[#allocation5 + $0x328] sm:$0xff]
    %v641 = vld [vmem:[#allocation5 + $0x330] sm:$0xff]
    %v642 = vld [vmem:[#allocation5 + $0x338] sm:$0xff]
    %v643 = vld [vmem:[#allocation5 + $0x340] sm:$0xff]
    %v644 = vld [vmem:[#allocation5 + $0x348] sm:$0xff]
    %v645 = vld [vmem:[#allocation5 + $0x350] sm:$0xff]
    %v646 = vld [vmem:[#allocation5 + $0x358] sm:$0xff]
    %v647 = vld [vmem:[#allocation5 + $0x360] sm:$0xff]
    %v648 = vld [vmem:[#allocation5 + $0x368] sm:$0xff]
    %v649 = vld [vmem:[#allocation5 + $0x370] sm:$0xff]
    %v650 = vld [vmem:[#allocation5 + $0x378] sm:$0xff]
    %v651 = vld [vmem:[#allocation5 + $0x380] sm:$0xff]
    %v652 = vld [vmem:[#allocation5 + $0x388] sm:$0xff]
    %v653 = vld [vmem:[#allocation5 + $0x390] sm:$0xff]
    %v654 = vld [vmem:[#allocation5 + $0x398] sm:$0xff]
    %v655 = vld [vmem:[#allocation5 + $0x3a0] sm:$0xff]
    %v656 = vld [vmem:[#allocation5 + $0x3a8] sm:$0xff]
    %v657 = vld [vmem:[#allocation5 + $0x3b0] sm:$0xff]
    %v658 = vld [vmem:[#allocation5 + $0x3b8] sm:$0xff]
    %v659 = vld [vmem:[#allocation5 + $0x3c0] sm:$0xff]
    %v660 = vld [vmem:[#allocation5 + $0x3c8] sm:$0xff]
    %v661 = vld [vmem:[#allocation5 + $0x3d0] sm:$0xff]
    %v662 = vld [vmem:[#allocation5 + $0x3d8] sm:$0xff]
    %v663 = vld [vmem:[#allocation5 + $0x3e0] sm:$0xff]
    %v664 = vld [vmem:[#allocation5 + $0x3e8] sm:$0xff]
    %v665 = vld [vmem:[#allocation5 + $0x3f0] sm:$0xff]
    %v666 = vld [vmem:[#allocation5 + $0x3f8] sm:$0xff]
    %667 = vmatprep.subr.mxu0 %v540
    %668 = vmatpush1.msra.mxu0 %v539
    %669 = vmatprep.subr.mxu0 %v542
    %670 = vmatpush1.msra.mxu0 %v541
    %671 = vmatprep.subr.mxu0 %v544
    %672 = vmatpush1.msra.mxu0 %v543
    %673 = vmatprep.subr.mxu0 %v546
    %674 = vmatpush1.msra.mxu0 %v545
    %675 = vmatprep.subr.mxu0 %v548
    %676 = vmatpush1.msra.mxu0 %v547
    %677 = vmatprep.subr.mxu0 %v550
    %678 = vmatpush1.msra.mxu0 %v549
    %679 = vmatprep.subr.mxu0 %v552
    %680 = vmatpush1.msra.mxu0 %v551
    %681 = vmatprep.subr.mxu0 %v554
    %682 = vmatpush1.msra.mxu0 %v553
    %683 = vmatprep.subr.mxu0 %v556
    %684 = vmatpush1.msra.mxu0 %v555
    %685 = vmatprep.subr.mxu0 %v558
    %686 = vmatpush1.msra.mxu0 %v557
    %687 = vmatprep.subr.mxu0 %v560
    %688 = vmatpush1.msra.mxu0 %v559
    %689 = vmatprep.subr.mxu0 %v562
    %690 = vmatpush1.msra.mxu0 %v561
    %691 = vmatprep.subr.mxu0 %v564
    %692 = vmatpush1.msra.mxu0 %v563
    %693 = vmatprep.subr.mxu0 %v566
    %694 = vmatpush1.msra.mxu0 %v565
    %695 = vmatprep.subr.mxu0 %v568
    %696 = vmatpush1.msra.mxu0 %v567
    %697 = vmatprep.subr.mxu0 %v570
    %698 = vmatpush1.msra.mxu0 %v569
    %699 = vmatprep.subr.mxu0 %v572
    %700 = vmatpush1.msra.mxu0 %v571
    %701 = vmatprep.subr.mxu0 %v574
    %702 = vmatpush1.msra.mxu0 %v573
    %703 = vmatprep.subr.mxu0 %v576
    %704 = vmatpush1.msra.mxu0 %v575
    %705 = vmatprep.subr.mxu0 %v578
    %706 = vmatpush1.msra.mxu0 %v577
    %707 = vmatprep.subr.mxu0 %v580
    %708 = vmatpush1.msra.mxu0 %v579
    %709 = vmatprep.subr.mxu0 %v582
    %710 = vmatpush1.msra.mxu0 %v581
    %711 = vmatprep.subr.mxu0 %v584
    %712 = vmatpush1.msra.mxu0 %v583
    %713 = vmatprep.subr.mxu0 %v586
    %714 = vmatpush1.msra.mxu0 %v585
    %715 = vmatprep.subr.mxu0 %v588
    %716 = vmatpush1.msra.mxu0 %v587
    %717 = vmatprep.subr.mxu0 %v590
    %718 = vmatpush1.msra.mxu0 %v589
    %719 = vmatprep.subr.mxu0 %v592
    %720 = vmatpush1.msra.mxu0 %v591
    %721 = vmatprep.subr.mxu0 %v594
    %722 = vmatpush1.msra.mxu0 %v593
    %723 = vmatprep.subr.mxu0 %v596
    %724 = vmatpush1.msra.mxu0 %v595
    %725 = vmatprep.subr.mxu0 %v598
    %726 = vmatpush1.msra.mxu0 %v597
    %727 = vmatprep.subr.mxu0 %v600
    %728 = vmatpush1.msra.mxu0 %v599
    %729 = vmatprep.subr.mxu0 %v602
    %730 = vmatpush1.msra.mxu0 %v601
    %731 = vmatprep.mubr.f32.mxu0 %v528
    %732 = vmatmul.mubr.f32.gmra.mrb[0].mxu0 %v527
    %v733 = vpop.f32.mrb[0].mxu0
    %v734 = vadd.f32 0.0, %v733
    %v735 = vpop.f32.mrb[0].mxu0
    %v736 = vadd.f32 0.0, %v735
    %737 = vdwg.mxu0
    %738 = vmatprep.subr.mxu0 %v604
    %739 = vmatpush1.msra.mxu0 %v603
    %740 = vmatprep.subr.mxu0 %v606
    %741 = vmatpush1.msra.mxu0 %v605
    %742 = vmatprep.subr.mxu0 %v608
    %743 = vmatpush1.msra.mxu0 %v607
    %744 = vmatprep.subr.mxu0 %v610
    %745 = vmatpush1.msra.mxu0 %v609
    %746 = vmatprep.subr.mxu0 %v612
    %747 = vmatpush1.msra.mxu0 %v611
    %748 = vmatprep.subr.mxu0 %v614
    %749 = vmatpush1.msra.mxu0 %v613
    %750 = vmatprep.subr.mxu0 %v616
    %751 = vmatpush1.msra.mxu0 %v615
    %752 = vmatprep.subr.mxu0 %v618
    %753 = vmatpush1.msra.mxu0 %v617
    %754 = vmatprep.subr.mxu0 %v620
    %755 = vmatpush1.msra.mxu0 %v619
    %756 = vmatprep.subr.mxu0 %v622
    %757 = vmatpush1.msra.mxu0 %v621
    %758 = vmatprep.subr.mxu0 %v624
    %759 = vmatpush1.msra.mxu0 %v623
    %760 = vmatprep.subr.mxu0 %v626
    %761 = vmatpush1.msra.mxu0 %v625
    %762 = vmatprep.subr.mxu0 %v628
    %763 = vmatpush1.msra.mxu0 %v627
    %764 = vmatprep.subr.mxu0 %v630
    %765 = vmatpush1.msra.mxu0 %v629
    %766 = vmatprep.subr.mxu0 %v632
    %767 = vmatpush1.msra.mxu0 %v631
    %768 = vmatprep.subr.mxu0 %v634
    %769 = vmatpush1.msra.mxu0 %v633
    %770 = vmatprep.subr.mxu0 %v636
    %771 = vmatpush1.msra.mxu0 %v635
    %772 = vmatprep.subr.mxu0 %v638
    %773 = vmatpush1.msra.mxu0 %v637
    %774 = vmatprep.subr.mxu0 %v640
    %775 = vmatpush1.msra.mxu0 %v639
    %776 = vmatprep.subr.mxu0 %v642
    %777 = vmatpush1.msra.mxu0 %v641
    %778 = vmatprep.subr.mxu0 %v644
    %779 = vmatpush1.msra.mxu0 %v643
    %780 = vmatprep.subr.mxu0 %v646
    %781 = vmatpush1.msra.mxu0 %v645
    %782 = vmatprep.subr.mxu0 %v648
    %783 = vmatpush1.msra.mxu0 %v647
    %784 = vmatprep.subr.mxu0 %v650
    %785 = vmatpush1.msra.mxu0 %v649
    %786 = vmatprep.subr.mxu0 %v652
    %787 = vmatpush1.msra.mxu0 %v651
    %788 = vmatprep.subr.mxu0 %v654
    %789 = vmatpush1.msra.mxu0 %v653
    %790 = vmatprep.subr.mxu0 %v656
    %791 = vmatpush1.msra.mxu0 %v655
    %792 = vmatprep.subr.mxu0 %v658
    %793 = vmatpush1.msra.mxu0 %v657
    %794 = vmatprep.subr.mxu0 %v660
    %795 = vmatpush1.msra.mxu0 %v659
    %796 = vmatprep.subr.mxu0 %v662
    %797 = vmatpush1.msra.mxu0 %v661
    %798 = vmatprep.subr.mxu0 %v664
    %799 = vmatpush1.msra.mxu0 %v663
    %800 = vmatprep.subr.mxu0 %v666
    %801 = vmatpush1.msra.mxu0 %v665
    %802 = vmatprep.mubr.f32.mxu0 %v536
    %803 = vmatmul.mubr.f32.gmra.mrb[0].mxu0 %v535
    %v804 = vpop.f32.mrb[0].mxu0
    %v805 = vadd.f32 %v734, %v804
    %v806 = vpop.f32.mrb[0].mxu0
    %v807 = vadd.f32 %v736, %v806
    %808 = vdwg.mxu0
    %v809 = vxor.u32 %v805, 2147483648
    %v810 = vxor.u32 %v807, 2147483648
    %v811 = vmul.f32 %v809, 1.442695
    %v812 = vpow.pop %v811
    %v813 = vmul.f32 %v810, 1.442695
    %v814 = vpow.pop %v813
    %v815 = vadd.f32 %v812, 1.0
    %v816 = vadd.f32 %v814, 1.0
    %v817 = vrcp.pop %v815
    %v818 = vmul.f32 1.0, %v817
    %v819 = vrcp.pop %v816
    %v820 = vmul.f32 1.0, %v819
    %v823 = vcombine.low %v818, %v820
    %v825 = vunpack.c.l.s4 1966171168
    %v826 = vunpack.c.0.s8 %v825
    %v827 = vlaneseq
    %v828 = vshrl.u32 %v827, 7
    %v829 = vsub.s32 %v826, %v828
    %v830 = vrot.slane %v823, %v829
    %v831 = vcombine.high %v830, %v830
    %v833 = vunpack.c.l.s4 1966171168
    %v834 = vunpack.c.0.s8 %v833
    %v835 = vlaneseq
    %v836 = vshrl.u32 %v835, 7
    %v837 = vsub.s32 %v834, %v836
    %v838 = vrot.slane %v830, %v837
    %v840 = vunpack.c.l.s4 1966171168
    %v841 = vunpack.c.0.s8 %v840
    %v842 = vlaneseq
    %v843 = vshrl.u32 %v842, 7
    %v844 = vsub.s32 %v841, %v843
    %v845 = vrot.slane %v831, %v844
    %v846 = vlaneseq
    %v847 = vshrl.u32 %v846, 7
    %v848 = vsub.s32 0, %v847
    %v849 = vrot.slane %v838, %v848
    %v850 = vlaneseq
    %v851 = vshrl.u32 %v850, 7
    %v852 = vsub.s32 1, %v851
    %v853 = vrot.slane %v838, %v852
    %v854 = vlaneseq
    %v855 = vshrl.u32 %v854, 7
    %v856 = vsub.s32 0, %v855
    %v857 = vrot.slane %v845, %v856
    %v858 = vlaneseq
    %v859 = vshrl.u32 %v858, 7
    %v860 = vsub.s32 1, %v859
    %v861 = vrot.slane %v845, %v860
    %v866 = vmul.f32 %v431, %v849
    %v867 = vmul.f32 %v432, %v853
    %v868 = vmul.f32 %v433, %v849
    %v869 = vmul.f32 %v434, %v853
    %v870 = vmul.f32 %v435, %v849
    %v871 = vmul.f32 %v436, %v853
    %v872 = vmul.f32 %v437, %v849
    %v873 = vmul.f32 %v438, %v853
    %v874 = vmul.f32 %v439, %v857
    %v875 = vmul.f32 %v440, %v861
    %v876 = vmul.f32 %v441, %v857
    %v877 = vmul.f32 %v442, %v861
    %v878 = vmul.f32 %v443, %v857
    %v879 = vmul.f32 %v444, %v861
    %v880 = vmul.f32 %v445, %v857
    %v881 = vmul.f32 %v446, %v861
    %882 = vst [vmem:[#allocation7] sm:$0xff] %v866
    %883 = vst [vmem:[#allocation7 + $0x8] sm:$0xff] %v867
    %884 = vst [vmem:[#allocation7 + $0x10] sm:$0xff] %v868
    %885 = vst [vmem:[#allocation7 + $0x18] sm:$0xff] %v869
    %886 = vst [vmem:[#allocation7 + $0x20] sm:$0xff] %v870
    %887 = vst [vmem:[#allocation7 + $0x28] sm:$0xff] %v871
    %888 = vst [vmem:[#allocation7 + $0x30] sm:$0xff] %v872
    %889 = vst [vmem:[#allocation7 + $0x38] sm:$0xff] %v873
    %890 = vst [vmem:[#allocation7 + $0x40] sm:$0xff] %v874
    %891 = vst [vmem:[#allocation7 + $0x48] sm:$0xff] %v875
    %892 = vst [vmem:[#allocation7 + $0x50] sm:$0xff] %v876
    %893 = vst [vmem:[#allocation7 + $0x58] sm:$0xff] %v877
    %894 = vst [vmem:[#allocation7 + $0x60] sm:$0xff] %v878
    %895 = vst [vmem:[#allocation7 + $0x68] sm:$0xff] %v879
    %896 = vst [vmem:[#allocation7 + $0x70] sm:$0xff] %v880
    %897 = vst [vmem:[#allocation7 + $0x78] sm:$0xff] %v881
    // Predicated region
    $region26: #{tpu_custom_call.1} parent=1 // pred_check
      _
    $region27: #{tpu_custom_call.1} parent=1 // pred_check_branch
      %899 = sbr.rel (0) target = $region29
    $region28: #{tpu_custom_call.1} parent=1 // pred_region
      %s901 = ssub.s32 2048, 2048
      %902 = vsyncadd [#allocation4], %s901
      %s903 = sshll.u32 [#allocation7], 4
      %s904 = int_to_ptr.vmem [resolvable:$true] %s903
      %909 = dma.vmem_to_hbm [thread:$0]  %s904, 2048, %s4, [#allocation4], 256, 256, 16
    $region29: #{tpu_custom_call.1} parent=1 // pred_fallthru
      _
    // Predicated region
    $region30: #{tpu_custom_call.1} parent=1 // pred_check
      _
    $region31: #{tpu_custom_call.1} parent=1 // pred_check_branch
      %911 = sbr.rel (0) target = $region33
    $region32: #{tpu_custom_call.1} parent=1 // pred_region
      %912 = dma.done [#allocation4], 2048
    $region33: #{tpu_custom_call.1} parent=1 // pred_fallthru
      _
    %913 = vsyncpa [#allocation3], 1
    %914 = vsyncpa [#allocation6], 1
    %915 = vsyncpa [#allocation4], 1

// kernel: tpu_custom_call.1
$region0: #{tpu_custom_call.1}
  #allocation0 [shape = 'u32[]', space=smem, size = 0x4, offset = 0x4, fixed_abs, tag = 'smem constant byte address 0x4 - core index']
  #allocation1 [shape = 'u32[144,128]{1,0:T(1,128)}', space=vmem, size = 0x12000, scoped, tag = 'internal scratch']
  %s0 = inlined_call_operand.hbm [shape: f32[2,32,256], index: 0, kind: input, shape index: {}]
  %s1 = inlined_call_operand.vmem [shape: f32[32,2], index: 1, kind: input, shape index: {}]
  %s2 = inlined_call_operand.vmem [shape: f32[2,32], index: 2, kind: input, shape index: {}]
  %s3 = inlined_call_operand.hbm [shape: f32[512,256], index: 3, kind: input, shape index: {}]
  %s4 = inlined_call_operand.hbm [shape: f32[2,32,256], index: 4, kind: output, shape index: {}]
  %s5 = sld [smem:[#allocation0]]
  $region34: #{tpu_custom_call.1} parent=0
    _
  %s7 = ssub.s32 1, %s5
  %s8 = scalar_select 0, %s7, %s5
  $region1: #{tpu_custom_call.1} parent=0
    #allocation2 [shape = 'u8[65536]{0}', space=vmem, size = 0x10000, scoped, tag = 'input window, operand 0, single buffered']
    #allocation3 [shape = 's32[1]{0}', space=sflag, size = 0x4, scoped, tag = 'scoped memory for tpu_custom_call.1']
    #allocation4 [shape = 's32[1]{0}', space=sflag, size = 0x4, scoped, tag = 'scoped memory for tpu_custom_call.1']
    #allocation5 [shape = 'u8[524288]{0}', space=vmem, size = 0x80000, scoped, tag = 'input window, operand 3, single buffered']
    #allocation6 [shape = 's32[1]{0}', space=sflag, size = 0x4, scoped, tag = 'scoped memory for tpu_custom_call.1']
    #allocation7 [shape = 'u8[65536]{0}', space=vmem, size = 0x10000, scoped, tag = 'output window, operand 0, single buffered']
    %9 = vsyncpa [#allocation3], 0
    %10 = vsyncpa [#allocation6], 0
    %11 = vsyncpa [#allocation4], 0
    // Predicated region
    $region2: #{tpu_custom_call.1} parent=1 // pred_check
      _
    $region3: #{tpu_custom_call.1} parent=1 // pred_check_branch
      %13 = sbr.rel (0) target = $region5
    $region4: #{tpu_custom_call.1} parent=1 // pred_region
      %s15 = ssub.s32 2048, 2048
      %16 = vsyncadd [#allocation3], %s15
      %s17 = sshll.u32 [#allocation2], 4
      %s18 = int_to_ptr.vmem [resolvable:$true] %s17
      %23 = dma.hbm_to_vmem [thread:$0]  %s0, 2048, %s18, [#allocation3], 256, 256, 16
    $region5: #{tpu_custom_call.1} parent=1 // pred_fallthru
      _
    // Predicated region
    $region6: #{tpu_custom_call.1} parent=1 // pred_check
      _
    $region7: #{tpu_custom_call.1} parent=1 // pred_check_branch
      %25 = sbr.rel (0) target = $region9
    $region8: #{tpu_custom_call.1} parent=1 // pred_region
      _
    $region9: #{tpu_custom_call.1} parent=1 // pred_fallthru
      _
    // Predicated region
    $region10: #{tpu_custom_call.1} parent=1 // pred_check
      _
    $region11: #{tpu_custom_call.1} parent=1 // pred_check_branch
      %27 = sbr.rel (0) target = $region13
    $region12: #{tpu_custom_call.1} parent=1 // pred_region
      _
    $region13: #{tpu_custom_call.1} parent=1 // pred_fallthru
      _
    // Predicated region
    $region14: #{tpu_custom_call.1} parent=1 // pred_check
      _
    $region15: #{tpu_custom_call.1} parent=1 // pred_check_branch
      %29 = sbr.rel (0) target = $region17
    $region16: #{tpu_custom_call.1} parent=1 // pred_region
      %s31 = ssub.s32 16384, 16384
      %32 = vsyncadd [#allocation6], %s31
      %s33 = sshll.u32 [#allocation5], 4
      %s34 = int_to_ptr.vmem [resolvable:$true] %s33
      %39 = dma.hbm_to_vmem [thread:$0]  %s3, 16384, %s34, [#allocation6], 256, 256, 16
    $region17: #{tpu_custom_call.1} parent=1 // pred_fallthru
      _
    // Predicated region
    $region18: #{tpu_custom_call.1} parent=1 // pred_check
      _
    $region19: #{tpu_custom_call.1} parent=1 // pred_check_branch
      %41 = sbr.rel (0) target = $region21
    $region20: #{tpu_custom_call.1} parent=1 // pred_region
      %42 = dma.done [#allocation3], 2048
    $region21: #{tpu_custom_call.1} parent=1 // pred_fallthru
      _
    // Predicated region
    $region22: #{tpu_custom_call.1} parent=1 // pred_check
      _
    $region23: #{tpu_custom_call.1} parent=1 // pred_check_branch
      %44 = sbr.rel (0) target = $region25
    $region24: #{tpu_custom_call.1} parent=1 // pred_region
      %45 = dma.done [#allocation6], 16384
    $region25: #{tpu_custom_call.1} parent=1 // pred_fallthru
      _
    %v46 = vld [vmem:[#allocation2] sm:$0xff]
    %v47 = vld [vmem:[#allocation2 + $0x8] sm:$0xff]
    %v48 = vld [vmem:[#allocation2 + $0x10] sm:$0xff]
    %v49 = vld [vmem:[#allocation2 + $0x18] sm:$0xff]
    %v50 = vld [vmem:[#allocation2 + $0x20] sm:$0xff]
    %v51 = vld [vmem:[#allocation2 + $0x28] sm:$0xff]
    %v52 = vld [vmem:[#allocation2 + $0x30] sm:$0xff]
    %v53 = vld [vmem:[#allocation2 + $0x38] sm:$0xff]
    %v54 = vld [vmem:[#allocation2 + $0x40] sm:$0xff]
    %v55 = vld [vmem:[#allocation2 + $0x48] sm:$0xff]
    %v56 = vld [vmem:[#allocation2 + $0x50] sm:$0xff]
    %v57 = vld [vmem:[#allocation2 + $0x58] sm:$0xff]
    %v58 = vld [vmem:[#allocation2 + $0x60] sm:$0xff]
    %v59 = vld [vmem:[#allocation2 + $0x68] sm:$0xff]
    %v60 = vld [vmem:[#allocation2 + $0x70] sm:$0xff]
    %v61 = vld [vmem:[#allocation2 + $0x78] sm:$0xff]
    %v62 = vadd.f32 %v46, %v47
    %63 = vadd.xlane.f32.xlu0 %v62
    %v64 = vpop.xlane.xlu0 %63
    %v65 = vadd.f32 %v48, %v49
    %66 = vadd.xlane.f32.xlu0 %v65
    %v67 = vpop.xlane.xlu0 %66
    %v68 = vadd.f32 %v50, %v51
    %69 = vadd.xlane.f32.xlu0 %v68
    %v70 = vpop.xlane.xlu0 %69
    %v71 = vadd.f32 %v52, %v53
    %72 = vadd.xlane.f32.xlu0 %v71
    %v73 = vpop.xlane.xlu0 %72
    %v74 = vadd.f32 %v54, %v55
    %75 = vadd.xlane.f32.xlu0 %v74
    %v76 = vpop.xlane.xlu0 %75
    %v77 = vadd.f32 %v56, %v57
    %78 = vadd.xlane.f32.xlu0 %v77
    %v79 = vpop.xlane.xlu0 %78
    %v80 = vadd.f32 %v58, %v59
    %81 = vadd.xlane.f32.xlu0 %v80
    %v82 = vpop.xlane.xlu0 %81
    %v83 = vadd.f32 %v60, %v61
    %84 = vadd.xlane.f32.xlu0 %v83
    %v85 = vpop.xlane.xlu0 %84
    %v86 = vmul.f32 %v64, 0.00390625
    %v87 = vmul.f32 %v67, 0.00390625
    %v88 = vmul.f32 %v70, 0.00390625
    %v89 = vmul.f32 %v73, 0.00390625
    %v90 = vmul.f32 %v76, 0.00390625
    %v91 = vmul.f32 %v79, 0.00390625
    %v92 = vmul.f32 %v82, 0.00390625
    %v93 = vmul.f32 %v85, 0.00390625
    %v94 = vmax.f32 %v46, %v47
    %95 = vmax.xlane.f32.xlu0 %v94
    %v96 = vpop.xlane.xlu0 %95
    %v97 = vmax.f32 %v48, %v49
    %98 = vmax.xlane.f32.xlu0 %v97
    %v99 = vpop.xlane.xlu0 %98
    %v100 = vmax.f32 %v50, %v51
    %101 = vmax.xlane.f32.xlu0 %v100
    %v102 = vpop.xlane.xlu0 %101
    %v103 = vmax.f32 %v52, %v53
    %104 = vmax.xlane.f32.xlu0 %v103
    %v105 = vpop.xlane.xlu0 %104
    %v106 = vmax.f32 %v54, %v55
    %107 = vmax.xlane.f32.xlu0 %v106
    %v108 = vpop.xlane.xlu0 %107
    %v109 = vmax.f32 %v56, %v57
    %110 = vmax.xlane.f32.xlu0 %v109
    %v111 = vpop.xlane.xlu0 %110
    %v112 = vmax.f32 %v58, %v59
    %113 = vmax.xlane.f32.xlu0 %v112
    %v114 = vpop.xlane.xlu0 %113
    %v115 = vmax.f32 %v60, %v61
    %116 = vmax.xlane.f32.xlu0 %v115
    %v117 = vpop.xlane.xlu0 %116
    %v118 = vld [vmem:[%s1] sm:$0xff]
    %v119 = vld [vmem:[%s1 + $0x8] sm:$0xff]
    %v120 = vld [vmem:[%s1 + $0x10] sm:$0xff]
    %v121 = vld [vmem:[%s1 + $0x18] sm:$0xff]
    %v122 = vld [vmem:[%s2] sm:$0x3]
    %v131 = vlaneseq
    %v132 = vand.u32 %v131, 127
    %v133 = vlaneseq
    %v134 = vshrl.u32 %v133, 7
    %v135 = vsub.s32 %v132, %v134
    %v136 = vrot.slane %v86, %v135
    %v137 = vadd.s32 %v132, 4294967288
    %v138 = vlaneseq
    %v139 = vshrl.u32 %v138, 7
    %v140 = vsub.s32 %v137, %v139
    %v141 = vrot.slane %v87, %v140
    %vm142 = vcmask 130112
    %v143 = vsel %vm142, %v141, %v136
    %v144 = vadd.s32 %v132, 4294967280
    %v145 = vlaneseq
    %v146 = vshrl.u32 %v145, 7
    %v147 = vsub.s32 %v144, %v146
    %v148 = vrot.slane %v88, %v147
    %vm149 = vcmask 195712
    %v150 = vsel %vm149, %v148, %v143
    %v151 = vadd.s32 %v132, 4294967272
    %v152 = vlaneseq
    %v153 = vshrl.u32 %v152, 7
    %v154 = vsub.s32 %v151, %v153
    %v155 = vrot.slane %v89, %v154
    %vm156 = vcmask 261312
    %v157 = vsel %vm156, %v155, %v150
    %v158 = vlaneseq
    %v159 = vshrl.u32 %v158, 7
    %v160 = vsub.s32 %v132, %v159
    %v161 = vrot.slane %v90, %v160
    %v162 = vlaneseq
    %v163 = vshrl.u32 %v162, 7
    %v164 = vsub.s32 %v137, %v163
    %v165 = vrot.slane %v91, %v164
    %v166 = vsel %vm142, %v165, %v161
    %v167 = vlaneseq
    %v168 = vshrl.u32 %v167, 7
    %v169 = vsub.s32 %v144, %v168
    %v170 = vrot.slane %v92, %v169
    %v171 = vsel %vm149, %v170, %v166
    %v172 = vlaneseq
    %v173 = vshrl.u32 %v172, 7
    %v174 = vsub.s32 %v151, %v173
    %v175 = vrot.slane %v93, %v174
    %v176 = vsel %vm156, %v175, %v171
    %vm177 = vcmask 1041409
    %v178 = vsel %vm177, %v176, %v157
    %v188 = vlaneseq
    %v189 = vshrl.u32 %v188, 7
    %v190 = vsub.s32 %v132, %v189
    %v191 = vrot.slane %v96, %v190
    %v192 = vlaneseq
    %v193 = vshrl.u32 %v192, 7
    %v194 = vsub.s32 %v137, %v193
    %v195 = vrot.slane %v99, %v194
    %v196 = vsel %vm142, %v195, %v191
    %v197 = vlaneseq
    %v198 = vshrl.u32 %v197, 7
    %v199 = vsub.s32 %v144, %v198
    %v200 = vrot.slane %v102, %v199
    %v201 = vsel %vm149, %v200, %v196
    %v202 = vlaneseq
    %v203 = vshrl.u32 %v202, 7
    %v204 = vsub.s32 %v151, %v203
    %v205 = vrot.slane %v105, %v204
    %v206 = vsel %vm156, %v205, %v201
    %v207 = vlaneseq
    %v208 = vshrl.u32 %v207, 7
    %v209 = vsub.s32 %v132, %v208
    %v210 = vrot.slane %v108, %v209
    %v211 = vlaneseq
    %v212 = vshrl.u32 %v211, 7
    %v213 = vsub.s32 %v137, %v212
    %v214 = vrot.slane %v111, %v213
    %v215 = vsel %vm142, %v214, %v210
    %v216 = vlaneseq
    %v217 = vshrl.u32 %v216, 7
    %v218 = vsub.s32 %v144, %v217
    %v219 = vrot.slane %v114, %v218
    %v220 = vsel %vm149, %v219, %v215
    %v221 = vlaneseq
    %v222 = vshrl.u32 %v221, 7
    %v223 = vsub.s32 %v151, %v222
    %v224 = vrot.slane %v117, %v223
    %v225 = vsel %vm156, %v224, %v220
    %vm226 = vcmask 1043459
    %v227 = vsel %vm226, %v225, %v206
    %vm229 = vcmask 1041408
    %v230 = vsel %vm229, %v178, %v227
    %vm231 = vcmask 261120
    %v233 = vsel %vm231, %v230, 0
    %235 = vmatprep.subr.mxu0 0.0
    %236 = vmatpush1.msra.mxu0 %v118
    %237 = vmatprep.subr.mxu0 0.0
    %238 = vmatpush1.msra.mxu0 %v119
    %239 = vmatprep.subr.mxu0 0.0
    %240 = vmatpush1.msra.mxu0 %v120
    %241 = vmatprep.subr.mxu0 0.0
    %242 = vmatpush1.msra.mxu0 %v121
    %243 = vmatprep.subr.mxu0 0.0
    %244 = vmatpush1.msra.mxu0 0.0
    %245 = vmatprep.subr.mxu0 0.0
    %246 = vmatpush1.msra.mxu0 0.0
    %247 = vmatprep.subr.mxu0 0.0
    %248 = vmatpush1.msra.mxu0 0.0
    %249 = vmatprep.subr.mxu0 0.0
    %250 = vmatpush1.msra.mxu0 0.0
    %251 = vmatprep.subr.mxu0 0.0
    %252 = vmatpush1.msra.mxu0 0.0
    %253 = vmatprep.subr.mxu0 0.0
    %254 = vmatpush1.msra.mxu0 0.0
    %255 = vmatprep.subr.mxu0 0.0
    %256 = vmatpush1.msra.mxu0 0.0
    %257 = vmatprep.subr.mxu0 0.0
    %258 = vmatpush1.msra.mxu0 0.0
    %259 = vmatprep.subr.mxu0 0.0
    %260 = vmatpush1.msra.mxu0 0.0
    %261 = vmatprep.subr.mxu0 0.0
    %262 = vmatpush1.msra.mxu0 0.0
    %263 = vmatprep.subr.mxu0 0.0
    %264 = vmatpush1.msra.mxu0 0.0
    %265 = vmatprep.subr.mxu0 0.0
    %266 = vmatpush1.msra.mxu0 0.0
    %267 = vmatprep.subr.mxu0 0.0
    %268 = vmatpush1.msra.mxu0 0.0
    %269 = vmatprep.subr.mxu0 0.0
    %270 = vmatpush1.msra.mxu0 0.0
    %271 = vmatprep.subr.mxu0 0.0
    %272 = vmatpush1.msra.mxu0 0.0
    %273 = vmatprep.subr.mxu0 0.0
    %274 = vmatpush1.msra.mxu0 0.0
    %275 = vmatprep.subr.mxu0 0.0
    %276 = vmatpush1.msra.mxu0 0.0
    %277 = vmatprep.subr.mxu0 0.0
    %278 = vmatpush1.msra.mxu0 0.0
    %279 = vmatprep.subr.mxu0 0.0
    %280 = vmatpush1.msra.mxu0 0.0
    %281 = vmatprep.subr.mxu0 0.0
    %282 = vmatpush1.msra.mxu0 0.0
    %283 = vmatprep.subr.mxu0 0.0
    %284 = vmatpush1.msra.mxu0 0.0
    %285 = vmatprep.subr.mxu0 0.0
    %286 = vmatpush1.msra.mxu0 0.0
    %287 = vmatprep.subr.mxu0 0.0
    %288 = vmatpush1.msra.mxu0 0.0
    %289 = vmatprep.subr.mxu0 0.0
    %290 = vmatpush1.msra.mxu0 0.0
    %291 = vmatprep.subr.mxu0 0.0
    %292 = vmatpush1.msra.mxu0 0.0
    %293 = vmatprep.subr.mxu0 0.0
    %294 = vmatpush1.msra.mxu0 0.0
    %295 = vmatprep.subr.mxu0 0.0
    %296 = vmatpush1.msra.mxu0 0.0
    %297 = vmatprep.subr.mxu0 0.0
    %298 = vmatpush1.msra.mxu0 0.0
    %299 = vmatprep.mubr.f32.mxu0 0.0
    %300 = vmatmul.mubr.f32.gmra.mrb[0].mxu0 %v233
    %v301 = vpop.f32.mrb[0].mxu0
    %v302 = vadd.f32 0.0, %v301
    %v303 = vpop.f32.mrb[0].mxu0
    %304 = vdwg.mxu0
    %v305 = vmax.f32 %v302, 0.0
    %v307 = vrot.slane %v305, 2
    %v309 = vadd.f32 %v305, %v307
    %vm310 = vcmask 15360
    %v312 = vsel %vm310, %v309, 0
    %v315 = vsel %vm229, %v122, 0
    %317 = vmatprep.subr.mxu0 0.0
    %318 = vmatpush1.msra.mxu0 %v315
    %319 = vmatprep.subr.mxu0 0.0
    %320 = vmatpush1.msra.mxu0 0.0
    %321 = vmatprep.subr.mxu0 0.0
    %322 = vmatpush1.msra.mxu0 0.0
    %323 = vmatprep.subr.mxu0 0.0
    %324 = vmatpush1.msra.mxu0 0.0
    %325 = vmatprep.subr.mxu0 0.0
    %326 = vmatpush1.msra.mxu0 0.0
    %327 = vmatprep.subr.mxu0 0.0
    %328 = vmatpush1.msra.mxu0 0.0
    %329 = vmatprep.subr.mxu0 0.0
    %330 = vmatpush1.msra.mxu0 0.0
    %331 = vmatprep.subr.mxu0 0.0
    %332 = vmatpush1.msra.mxu0 0.0
    %333 = vmatprep.subr.mxu0 0.0
    %334 = vmatpush1.msra.mxu0 0.0
    %335 = vmatprep.subr.mxu0 0.0
    %336 = vmatpush1.msra.mxu0 0.0
    %337 = vmatprep.subr.mxu0 0.0
    %338 = vmatpush1.msra.mxu0 0.0
    %339 = vmatprep.subr.mxu0 0.0
    %340 = vmatpush1.msra.mxu0 0.0
    %341 = vmatprep.subr.mxu0 0.0
    %342 = vmatpush1.msra.mxu0 0.0
    %343 = vmatprep.subr.mxu0 0.0
    %344 = vmatpush1.msra.mxu0 0.0
    %345 = vmatprep.subr.mxu0 0.0
    %346 = vmatpush1.msra.mxu0 0.0
    %347 = vmatprep.subr.mxu0 0.0
    %348 = vmatpush1.msra.mxu0 0.0
    %349 = vmatprep.subr.mxu0 0.0
    %350 = vmatpush1.msra.mxu0 0.0
    %351 = vmatprep.subr.mxu0 0.0
    %352 = vmatpush1.msra.mxu0 0.0
    %353 = vmatprep.subr.mxu0 0.0
    %354 = vmatpush1.msra.mxu0 0.0
    %355 = vmatprep.subr.mxu0 0.0
    %356 = vmatpush1.msra.mxu0 0.0
    %357 = vmatprep.subr.mxu0 0.0
    %358 = vmatpush1.msra.mxu0 0.0
    %359 = vmatprep.subr.mxu0 0.0
    %360 = vmatpush1.msra.mxu0 0.0
    %361 = vmatprep.subr.mxu0 0.0
    %362 = vmatpush1.msra.mxu0 0.0
    %363 = vmatprep.subr.mxu0 0.0
    %364 = vmatpush1.msra.mxu0 0.0
    %365 = vmatprep.subr.mxu0 0.0
    %366 = vmatpush1.msra.mxu0 0.0
    %367 = vmatprep.subr.mxu0 0.0
    %368 = vmatpush1.msra.mxu0 0.0
    %369 = vmatprep.subr.mxu0 0.0
    %370 = vmatpush1.msra.mxu0 0.0
    %371 = vmatprep.subr.mxu0 0.0
    %372 = vmatpush1.msra.mxu0 0.0
    %373 = vmatprep.subr.mxu0 0.0
    %374 = vmatpush1.msra.mxu0 0.0
    %375 = vmatprep.subr.mxu0 0.0
    %376 = vmatpush1.msra.mxu0 0.0
    %377 = vmatprep.subr.mxu0 0.0
    %378 = vmatpush1.msra.mxu0 0.0
    %379 = vmatprep.subr.mxu0 0.0
    %380 = vmatpush1.msra.mxu0 0.0
    %381 = vmatprep.mubr.f32.mxu0 0.0
    %382 = vmatmul.mubr.f32.gmra.mrb[0].mxu0 %v312
    %v383 = vpop.f32.mrb[0].mxu0
    %v384 = vadd.f32 0.0, %v383
    %v385 = vpop.f32.mrb[0].mxu0
    %386 = vdwg.mxu0
    %v387 = vxor.u32 %v384, 2147483648
    %v388 = vmul.f32 %v387, 1.442695
    %v389 = vpow.pop %v388
    %v390 = vadd.f32 %v389, 1.0
    %v391 = vrcp.pop %v390
    %v392 = vmul.f32 1.0, %v391
    %v393 = vlaneseq
    %v394 = vshrl.u32 %v393, 7
    %v395 = vsub.s32 0, %v394
    %v396 = vrot.slane %v392, %v395
    %398 = vbcast.lane.b32.xlu0 %v396, 256
    %v399 = vpop.permute.xlu0 %398
    %s401 = sor.u32 256, 8
    %402 = vbcast.lane.b32.xlu0 %v396, %s401
    %v403 = vpop.permute.xlu0 %402
    %s405 = sor.u32 256, 16
    %406 = vbcast.lane.b32.xlu0 %v396, %s405
    %v407 = vpop.permute.xlu0 %406
    %s409 = sor.u32 256, 24
    %410 = vbcast.lane.b32.xlu0 %v396, %s409
    %v411 = vpop.permute.xlu0 %410
    %v412 = vlaneseq
    %v413 = vshrl.u32 %v412, 7
    %v414 = vsub.s32 1, %v413
    %v415 = vrot.slane %v392, %v414
    %417 = vbcast.lane.b32.xlu0 %v415, 256
    %v418 = vpop.permute.xlu0 %417
    %s420 = sor.u32 256, 8
    %421 = vbcast.lane.b32.xlu0 %v415, %s420
    %v422 = vpop.permute.xlu0 %421
    %s424 = sor.u32 256, 16
    %425 = vbcast.lane.b32.xlu0 %v415, %s424
    %v426 = vpop.permute.xlu0 %425
    %s428 = sor.u32 256, 24
    %429 = vbcast.lane.b32.xlu0 %v415, %s428
    %v430 = vpop.permute.xlu0 %429
    %v431 = vmul.f32 %v46, %v399
    %v432 = vmul.f32 %v47, %v399
    %v433 = vmul.f32 %v48, %v403
    %v434 = vmul.f32 %v49, %v403
    %v435 = vmul.f32 %v50, %v407
    %v436 = vmul.f32 %v51, %v407
    %v437 = vmul.f32 %v52, %v411
    %v438 = vmul.f32 %v53, %v411
    %v439 = vmul.f32 %v54, %v418
    %v440 = vmul.f32 %v55, %v418
    %v441 = vmul.f32 %v56, %v422
    %v442 = vmul.f32 %v57, %v422
    %v443 = vmul.f32 %v58, %v426
    %v444 = vmul.f32 %v59, %v426
    %v445 = vmul.f32 %v60, %v430
    %v446 = vmul.f32 %v61, %v430
    %v447 = vadd.f32 %v431, %v433
    %v448 = vadd.f32 %v447, %v435
    %v449 = vadd.f32 %v448, %v437
    %v450 = vrot.slane %v449, 4
    %v451 = vadd.f32 %v449, %v450
    %v452 = vrot.slane %v451, 2
    %v453 = vadd.f32 %v451, %v452
    %v454 = vrot.slane %v453, 1
    %v455 = vadd.f32 %v453, %v454
    %v456 = vadd.f32 %v432, %v434
    %v457 = vadd.f32 %v456, %v436
    %v458 = vadd.f32 %v457, %v438
    %v459 = vrot.slane %v458, 4
    %v460 = vadd.f32 %v458, %v459
    %v461 = vrot.slane %v460, 2
    %v462 = vadd.f32 %v460, %v461
    %v463 = vrot.slane %v462, 1
    %v464 = vadd.f32 %v462, %v463
    %v465 = vadd.f32 %v439, %v441
    %v466 = vadd.f32 %v465, %v443
    %v467 = vadd.f32 %v466, %v445
    %v468 = vrot.slane %v467, 4
    %v469 = vadd.f32 %v467, %v468
    %v470 = vrot.slane %v469, 2
    %v471 = vadd.f32 %v469, %v470
    %v472 = vrot.slane %v471, 1
    %v473 = vadd.f32 %v471, %v472
    %v474 = vadd.f32 %v440, %v442
    %v475 = vadd.f32 %v474, %v444
    %v476 = vadd.f32 %v475, %v446
    %v477 = vrot.slane %v476, 4
    %v478 = vadd.f32 %v476, %v477
    %v479 = vrot.slane %v478, 2
    %v480 = vadd.f32 %v478, %v479
    %v481 = vrot.slane %v480, 1
    %v482 = vadd.f32 %v480, %v481
    %v483 = vmul.f32 %v455, 0.03125
    %v484 = vmul.f32 %v464, 0.03125
    %v485 = vmul.f32 %v473, 0.03125
    %v486 = vmul.f32 %v482, 0.03125
    %v487 = vmax.f32 %v431, %v433
    %v488 = vmax.f32 %v487, %v435
    %v489 = vmax.f32 %v488, %v437
    %v490 = vrot.slane %v489, 4
    %v491 = vmax.f32 %v489, %v490
    %v492 = vrot.slane %v491, 2
    %v493 = vmax.f32 %v491, %v492
    %v494 = vrot.slane %v493, 1
    %v495 = vmax.f32 %v493, %v494
    %v496 = vmax.f32 %v432, %v434
    %v497 = vmax.f32 %v496, %v436
    %v498 = vmax.f32 %v497, %v438
    %v499 = vrot.slane %v498, 4
    %v500 = vmax.f32 %v498, %v499
    %v501 = vrot.slane %v500, 2
    %v502 = vmax.f32 %v500, %v501
    %v503 = vrot.slane %v502, 1
    %v504 = vmax.f32 %v502, %v503
    %v505 = vmax.f32 %v439, %v441
    %v506 = vmax.f32 %v505, %v443
    %v507 = vmax.f32 %v506, %v445
    %v508 = vrot.slane %v507, 4
    %v509 = vmax.f32 %v507, %v508
    %v510 = vrot.slane %v509, 2
    %v511 = vmax.f32 %v509, %v510
    %v512 = vrot.slane %v511, 1
    %v513 = vmax.f32 %v511, %v512
    %v514 = vmax.f32 %v440, %v442
    %v515 = vmax.f32 %v514, %v444
    %v516 = vmax.f32 %v515, %v446
    %v517 = vrot.slane %v516, 4
    %v518 = vmax.f32 %v516, %v517
    %v519 = vrot.slane %v518, 2
    %v520 = vmax.f32 %v518, %v519
    %v521 = vrot.slane %v520, 1
    %v522 = vmax.f32 %v520, %v521
    %v527 = vsel %vm177, %v485, %v483
    %v528 = vsel %vm177, %v486, %v484
    %v535 = vsel %vm177, %v513, %v495
    %v536 = vsel %vm177, %v522, %v504
    %v539 = vld [vmem:[#allocation5] sm:$0xff]
    %v540 = vld [vmem:[#allocation5 + $0x8] sm:$0xff]
    %v541 = vld [vmem:[#allocation5 + $0x10] sm:$0xff]
    %v542 = vld [vmem:[#allocation5 + $0x18] sm:$0xff]
    %v543 = vld [vmem:[#allocation5 + $0x20] sm:$0xff]
    %v544 = vld [vmem:[#allocation5 + $0x28] sm:$0xff]
    %v545 = vld [vmem:[#allocation5 + $0x30] sm:$0xff]
    %v546 = vld [vmem:[#allocation5 + $0x38] sm:$0xff]
    %v547 = vld [vmem:[#allocation5 + $0x40] sm:$0xff]
    %v548 = vld [vmem:[#allocation5 + $0x48] sm:$0xff]
    %v549 = vld [vmem:[#allocation5 + $0x50] sm:$0xff]
    %v550 = vld [vmem:[#allocation5 + $0x58] sm:$0xff]
    %v551 = vld [vmem:[#allocation5 + $0x60] sm:$0xff]
    %v552 = vld [vmem:[#allocation5 + $0x68] sm:$0xff]
    %v553 = vld [vmem:[#allocation5 + $0x70] sm:$0xff]
    %v554 = vld [vmem:[#allocation5 + $0x78] sm:$0xff]
    %v555 = vld [vmem:[#allocation5 + $0x80] sm:$0xff]
    %v556 = vld [vmem:[#allocation5 + $0x88] sm:$0xff]
    %v557 = vld [vmem:[#allocation5 + $0x90] sm:$0xff]
    %v558 = vld [vmem:[#allocation5 + $0x98] sm:$0xff]
    %v559 = vld [vmem:[#allocation5 + $0xa0] sm:$0xff]
    %v560 = vld [vmem:[#allocation5 + $0xa8] sm:$0xff]
    %v561 = vld [vmem:[#allocation5 + $0xb0] sm:$0xff]
    %v562 = vld [vmem:[#allocation5 + $0xb8] sm:$0xff]
    %v563 = vld [vmem:[#allocation5 + $0xc0] sm:$0xff]
    %v564 = vld [vmem:[#allocation5 + $0xc8] sm:$0xff]
    %v565 = vld [vmem:[#allocation5 + $0xd0] sm:$0xff]
    %v566 = vld [vmem:[#allocation5 + $0xd8] sm:$0xff]
    %v567 = vld [vmem:[#allocation5 + $0xe0] sm:$0xff]
    %v568 = vld [vmem:[#allocation5 + $0xe8] sm:$0xff]
    %v569 = vld [vmem:[#allocation5 + $0xf0] sm:$0xff]
    %v570 = vld [vmem:[#allocation5 + $0xf8] sm:$0xff]
    %v571 = vld [vmem:[#allocation5 + $0x100] sm:$0xff]
    %v572 = vld [vmem:[#allocation5 + $0x108] sm:$0xff]
    %v573 = vld [vmem:[#allocation5 + $0x110] sm:$0xff]
    %v574 = vld [vmem:[#allocation5 + $0x118] sm:$0xff]
    %v575 = vld [vmem:[#allocation5 + $0x120] sm:$0xff]
    %v576 = vld [vmem:[#allocation5 + $0x128] sm:$0xff]
    %v577 = vld [vmem:[#allocation5 + $0x130] sm:$0xff]
    %v578 = vld [vmem:[#allocation5 + $0x138] sm:$0xff]
    %v579 = vld [vmem:[#allocation5 + $0x140] sm:$0xff]
    %v580 = vld [vmem:[#allocation5 + $0x148] sm:$0xff]
    %v581 = vld [vmem:[#allocation5 + $0x150] sm:$0xff]
    %v582 = vld [vmem:[#allocation5 + $0x158] sm:$0xff]
    %v583 = vld [vmem:[#allocation5 + $0x160] sm:$0xff]
    %v584 = vld [vmem:[#allocation5 + $0x168] sm:$0xff]
    %v585 = vld [vmem:[#allocation5 + $0x170] sm:$0xff]
    %v586 = vld [vmem:[#allocation5 + $0x178] sm:$0xff]
    %v587 = vld [vmem:[#allocation5 + $0x180] sm:$0xff]
    %v588 = vld [vmem:[#allocation5 + $0x188] sm:$0xff]
    %v589 = vld [vmem:[#allocation5 + $0x190] sm:$0xff]
    %v590 = vld [vmem:[#allocation5 + $0x198] sm:$0xff]
    %v591 = vld [vmem:[#allocation5 + $0x1a0] sm:$0xff]
    %v592 = vld [vmem:[#allocation5 + $0x1a8] sm:$0xff]
    %v593 = vld [vmem:[#allocation5 + $0x1b0] sm:$0xff]
    %v594 = vld [vmem:[#allocation5 + $0x1b8] sm:$0xff]
    %v595 = vld [vmem:[#allocation5 + $0x1c0] sm:$0xff]
    %v596 = vld [vmem:[#allocation5 + $0x1c8] sm:$0xff]
    %v597 = vld [vmem:[#allocation5 + $0x1d0] sm:$0xff]
    %v598 = vld [vmem:[#allocation5 + $0x1d8] sm:$0xff]
    %v599 = vld [vmem:[#allocation5 + $0x1e0] sm:$0xff]
    %v600 = vld [vmem:[#allocation5 + $0x1e8] sm:$0xff]
    %v601 = vld [vmem:[#allocation5 + $0x1f0] sm:$0xff]
    %v602 = vld [vmem:[#allocation5 + $0x1f8] sm:$0xff]
    %v603 = vld [vmem:[#allocation5 + $0x200] sm:$0xff]
    %v604 = vld [vmem:[#allocation5 + $0x208] sm:$0xff]
    %v605 = vld [vmem:[#allocation5 + $0x210] sm:$0xff]
    %v606 = vld [vmem:[#allocation5 + $0x218] sm:$0xff]
    %v607 = vld [vmem:[#allocation5 + $0x220] sm:$0xff]
    %v608 = vld [vmem:[#allocation5 + $0x228] sm:$0xff]
    %v609 = vld [vmem:[#allocation5 + $0x230] sm:$0xff]
    %v610 = vld [vmem:[#allocation5 + $0x238] sm:$0xff]
    %v611 = vld [vmem:[#allocation5 + $0x240] sm:$0xff]
    %v612 = vld [vmem:[#allocation5 + $0x248] sm:$0xff]
    %v613 = vld [vmem:[#allocation5 + $0x250] sm:$0xff]
    %v614 = vld [vmem:[#allocation5 + $0x258] sm:$0xff]
    %v615 = vld [vmem:[#allocation5 + $0x260] sm:$0xff]
    %v616 = vld [vmem:[#allocation5 + $0x268] sm:$0xff]
    %v617 = vld [vmem:[#allocation5 + $0x270] sm:$0xff]
    %v618 = vld [vmem:[#allocation5 + $0x278] sm:$0xff]
    %v619 = vld [vmem:[#allocation5 + $0x280] sm:$0xff]
    %v620 = vld [vmem:[#allocation5 + $0x288] sm:$0xff]
    %v621 = vld [vmem:[#allocation5 + $0x290] sm:$0xff]
    %v622 = vld [vmem:[#allocation5 + $0x298] sm:$0xff]
    %v623 = vld [vmem:[#allocation5 + $0x2a0] sm:$0xff]
    %v624 = vld [vmem:[#allocation5 + $0x2a8] sm:$0xff]
    %v625 = vld [vmem:[#allocation5 + $0x2b0] sm:$0xff]
    %v626 = vld [vmem:[#allocation5 + $0x2b8] sm:$0xff]
    %v627 = vld [vmem:[#allocation5 + $0x2c0] sm:$0xff]
    %v628 = vld [vmem:[#allocation5 + $0x2c8] sm:$0xff]
    %v629 = vld [vmem:[#allocation5 + $0x2d0] sm:$0xff]
    %v630 = vld [vmem:[#allocation5 + $0x2d8] sm:$0xff]
    %v631 = vld [vmem:[#allocation5 + $0x2e0] sm:$0xff]
    %v632 = vld [vmem:[#allocation5 + $0x2e8] sm:$0xff]
    %v633 = vld [vmem:[#allocation5 + $0x2f0] sm:$0xff]
    %v634 = vld [vmem:[#allocation5 + $0x2f8] sm:$0xff]
    %v635 = vld [vmem:[#allocation5 + $0x300] sm:$0xff]
    %v636 = vld [vmem:[#allocation5 + $0x308] sm:$0xff]
    %v637 = vld [vmem:[#allocation5 + $0x310] sm:$0xff]
    %v638 = vld [vmem:[#allocation5 + $0x318] sm:$0xff]
    %v639 = vld [vmem:[#allocation5 + $0x320] sm:$0xff]
    %v640 = vld [vmem:[#allocation5 + $0x328] sm:$0xff]
    %v641 = vld [vmem:[#allocation5 + $0x330] sm:$0xff]
    %v642 = vld [vmem:[#allocation5 + $0x338] sm:$0xff]
    %v643 = vld [vmem:[#allocation5 + $0x340] sm:$0xff]
    %v644 = vld [vmem:[#allocation5 + $0x348] sm:$0xff]
    %v645 = vld [vmem:[#allocation5 + $0x350] sm:$0xff]
    %v646 = vld [vmem:[#allocation5 + $0x358] sm:$0xff]
    %v647 = vld [vmem:[#allocation5 + $0x360] sm:$0xff]
    %v648 = vld [vmem:[#allocation5 + $0x368] sm:$0xff]
    %v649 = vld [vmem:[#allocation5 + $0x370] sm:$0xff]
    %v650 = vld [vmem:[#allocation5 + $0x378] sm:$0xff]
    %v651 = vld [vmem:[#allocation5 + $0x380] sm:$0xff]
    %v652 = vld [vmem:[#allocation5 + $0x388] sm:$0xff]
    %v653 = vld [vmem:[#allocation5 + $0x390] sm:$0xff]
    %v654 = vld [vmem:[#allocation5 + $0x398] sm:$0xff]
    %v655 = vld [vmem:[#allocation5 + $0x3a0] sm:$0xff]
    %v656 = vld [vmem:[#allocation5 + $0x3a8] sm:$0xff]
    %v657 = vld [vmem:[#allocation5 + $0x3b0] sm:$0xff]
    %v658 = vld [vmem:[#allocation5 + $0x3b8] sm:$0xff]
    %v659 = vld [vmem:[#allocation5 + $0x3c0] sm:$0xff]
    %v660 = vld [vmem:[#allocation5 + $0x3c8] sm:$0xff]
    %v661 = vld [vmem:[#allocation5 + $0x3d0] sm:$0xff]
    %v662 = vld [vmem:[#allocation5 + $0x3d8] sm:$0xff]
    %v663 = vld [vmem:[#allocation5 + $0x3e0] sm:$0xff]
    %v664 = vld [vmem:[#allocation5 + $0x3e8] sm:$0xff]
    %v665 = vld [vmem:[#allocation5 + $0x3f0] sm:$0xff]
    %v666 = vld [vmem:[#allocation5 + $0x3f8] sm:$0xff]
    %667 = vmatprep.subr.mxu0 %v540
    %668 = vmatpush1.msra.mxu0 %v539
    %669 = vmatprep.subr.mxu0 %v542
    %670 = vmatpush1.msra.mxu0 %v541
    %671 = vmatprep.subr.mxu0 %v544
    %672 = vmatpush1.msra.mxu0 %v543
    %673 = vmatprep.subr.mxu0 %v546
    %674 = vmatpush1.msra.mxu0 %v545
    %675 = vmatprep.subr.mxu0 %v548
    %676 = vmatpush1.msra.mxu0 %v547
    %677 = vmatprep.subr.mxu0 %v550
    %678 = vmatpush1.msra.mxu0 %v549
    %679 = vmatprep.subr.mxu0 %v552
    %680 = vmatpush1.msra.mxu0 %v551
    %681 = vmatprep.subr.mxu0 %v554
    %682 = vmatpush1.msra.mxu0 %v553
    %683 = vmatprep.subr.mxu0 %v556
    %684 = vmatpush1.msra.mxu0 %v555
    %685 = vmatprep.subr.mxu0 %v558
    %686 = vmatpush1.msra.mxu0 %v557
    %687 = vmatprep.subr.mxu0 %v560
    %688 = vmatpush1.msra.mxu0 %v559
    %689 = vmatprep.subr.mxu0 %v562
    %690 = vmatpush1.msra.mxu0 %v561
    %691 = vmatprep.subr.mxu0 %v564
    %692 = vmatpush1.msra.mxu0 %v563
    %693 = vmatprep.subr.mxu0 %v566
    %694 = vmatpush1.msra.mxu0 %v565
    %695 = vmatprep.subr.mxu0 %v568
    %696 = vmatpush1.msra.mxu0 %v567
    %697 = vmatprep.subr.mxu0 %v570
    %698 = vmatpush1.msra.mxu0 %v569
    %699 = vmatprep.subr.mxu0 %v572
    %700 = vmatpush1.msra.mxu0 %v571
    %701 = vmatprep.subr.mxu0 %v574
    %702 = vmatpush1.msra.mxu0 %v573
    %703 = vmatprep.subr.mxu0 %v576
    %704 = vmatpush1.msra.mxu0 %v575
    %705 = vmatprep.subr.mxu0 %v578
    %706 = vmatpush1.msra.mxu0 %v577
    %707 = vmatprep.subr.mxu0 %v580
    %708 = vmatpush1.msra.mxu0 %v579
    %709 = vmatprep.subr.mxu0 %v582
    %710 = vmatpush1.msra.mxu0 %v581
    %711 = vmatprep.subr.mxu0 %v584
    %712 = vmatpush1.msra.mxu0 %v583
    %713 = vmatprep.subr.mxu0 %v586
    %714 = vmatpush1.msra.mxu0 %v585
    %715 = vmatprep.subr.mxu0 %v588
    %716 = vmatpush1.msra.mxu0 %v587
    %717 = vmatprep.subr.mxu0 %v590
    %718 = vmatpush1.msra.mxu0 %v589
    %719 = vmatprep.subr.mxu0 %v592
    %720 = vmatpush1.msra.mxu0 %v591
    %721 = vmatprep.subr.mxu0 %v594
    %722 = vmatpush1.msra.mxu0 %v593
    %723 = vmatprep.subr.mxu0 %v596
    %724 = vmatpush1.msra.mxu0 %v595
    %725 = vmatprep.subr.mxu0 %v598
    %726 = vmatpush1.msra.mxu0 %v597
    %727 = vmatprep.subr.mxu0 %v600
    %728 = vmatpush1.msra.mxu0 %v599
    %729 = vmatprep.subr.mxu0 %v602
    %730 = vmatpush1.msra.mxu0 %v601
    %731 = vmatprep.mubr.f32.mxu0 %v528
    %732 = vmatmul.mubr.f32.gmra.mrb[0].mxu0 %v527
    %v733 = vpop.f32.mrb[0].mxu0
    %v734 = vadd.f32 0.0, %v733
    %v735 = vpop.f32.mrb[0].mxu0
    %v736 = vadd.f32 0.0, %v735
    %737 = vdwg.mxu0
    %738 = vmatprep.subr.mxu0 %v604
    %739 = vmatpush1.msra.mxu0 %v603
    %740 = vmatprep.subr.mxu0 %v606
    %741 = vmatpush1.msra.mxu0 %v605
    %742 = vmatprep.subr.mxu0 %v608
    %743 = vmatpush1.msra.mxu0 %v607
    %744 = vmatprep.subr.mxu0 %v610
    %745 = vmatpush1.msra.mxu0 %v609
    %746 = vmatprep.subr.mxu0 %v612
    %747 = vmatpush1.msra.mxu0 %v611
    %748 = vmatprep.subr.mxu0 %v614
    %749 = vmatpush1.msra.mxu0 %v613
    %750 = vmatprep.subr.mxu0 %v616
    %751 = vmatpush1.msra.mxu0 %v615
    %752 = vmatprep.subr.mxu0 %v618
    %753 = vmatpush1.msra.mxu0 %v617
    %754 = vmatprep.subr.mxu0 %v620
    %755 = vmatpush1.msra.mxu0 %v619
    %756 = vmatprep.subr.mxu0 %v622
    %757 = vmatpush1.msra.mxu0 %v621
    %758 = vmatprep.subr.mxu0 %v624
    %759 = vmatpush1.msra.mxu0 %v623
    %760 = vmatprep.subr.mxu0 %v626
    %761 = vmatpush1.msra.mxu0 %v625
    %762 = vmatprep.subr.mxu0 %v628
    %763 = vmatpush1.msra.mxu0 %v627
    %764 = vmatprep.subr.mxu0 %v630
    %765 = vmatpush1.msra.mxu0 %v629
    %766 = vmatprep.subr.mxu0 %v632
    %767 = vmatpush1.msra.mxu0 %v631
    %768 = vmatprep.subr.mxu0 %v634
    %769 = vmatpush1.msra.mxu0 %v633
    %770 = vmatprep.subr.mxu0 %v636
    %771 = vmatpush1.msra.mxu0 %v635
    %772 = vmatprep.subr.mxu0 %v638
    %773 = vmatpush1.msra.mxu0 %v637
    %774 = vmatprep.subr.mxu0 %v640
    %775 = vmatpush1.msra.mxu0 %v639
    %776 = vmatprep.subr.mxu0 %v642
    %777 = vmatpush1.msra.mxu0 %v641
    %778 = vmatprep.subr.mxu0 %v644
    %779 = vmatpush1.msra.mxu0 %v643
    %780 = vmatprep.subr.mxu0 %v646
    %781 = vmatpush1.msra.mxu0 %v645
    %782 = vmatprep.subr.mxu0 %v648
    %783 = vmatpush1.msra.mxu0 %v647
    %784 = vmatprep.subr.mxu0 %v650
    %785 = vmatpush1.msra.mxu0 %v649
    %786 = vmatprep.subr.mxu0 %v652
    %787 = vmatpush1.msra.mxu0 %v651
    %788 = vmatprep.subr.mxu0 %v654
    %789 = vmatpush1.msra.mxu0 %v653
    %790 = vmatprep.subr.mxu0 %v656
    %791 = vmatpush1.msra.mxu0 %v655
    %792 = vmatprep.subr.mxu0 %v658
    %793 = vmatpush1.msra.mxu0 %v657
    %794 = vmatprep.subr.mxu0 %v660
    %795 = vmatpush1.msra.mxu0 %v659
    %796 = vmatprep.subr.mxu0 %v662
    %797 = vmatpush1.msra.mxu0 %v661
    %798 = vmatprep.subr.mxu0 %v664
    %799 = vmatpush1.msra.mxu0 %v663
    %800 = vmatprep.subr.mxu0 %v666
    %801 = vmatpush1.msra.mxu0 %v665
    %802 = vmatprep.mubr.f32.mxu0 %v536
    %803 = vmatmul.mubr.f32.gmra.mrb[0].mxu0 %v535
    %v804 = vpop.f32.mrb[0].mxu0
    %v805 = vadd.f32 %v734, %v804
    %v806 = vpop.f32.mrb[0].mxu0
    %v807 = vadd.f32 %v736, %v806
    %808 = vdwg.mxu0
    %v809 = vxor.u32 %v805, 2147483648
    %v810 = vxor.u32 %v807, 2147483648
    %v811 = vmul.f32 %v809, 1.442695
    %v812 = vpow.pop %v811
    %v813 = vmul.f32 %v810, 1.442695
    %v814 = vpow.pop %v813
    %v815 = vadd.f32 %v812, 1.0
    %v816 = vadd.f32 %v814, 1.0
    %v817 = vrcp.pop %v815
    %v818 = vmul.f32 1.0, %v817
    %v819 = vrcp.pop %v816
    %v820 = vmul.f32 1.0, %v819
    %v823 = vcombine.low %v818, %v820
    %v825 = vunpack.c.l.s4 1966171168
    %v826 = vunpack.c.0.s8 %v825
    %v827 = vlaneseq
    %v828 = vshrl.u32 %v827, 7
    %v829 = vsub.s32 %v826, %v828
    %v830 = vrot.slane %v823, %v829
    %v831 = vcombine.high %v830, %v830
    %v833 = vunpack.c.l.s4 1966171168
    %v834 = vunpack.c.0.s8 %v833
    %v835 = vlaneseq
    %v836 = vshrl.u32 %v835, 7
    %v837 = vsub.s32 %v834, %v836
    %v838 = vrot.slane %v830, %v837
    %v840 = vunpack.c.l.s4 1966171168
    %v841 = vunpack.c.0.s8 %v840
    %v842 = vlaneseq
    %v843 = vshrl.u32 %v842, 7
    %v844 = vsub.s32 %v841, %v843
    %v845 = vrot.slane %v831, %v844
    %v846 = vlaneseq
    %v847 = vshrl.u32 %v846, 7
    %v848 = vsub.s32 0, %v847
    %v849 = vrot.slane %v838, %v848
    %v850 = vlaneseq
    %v851 = vshrl.u32 %v850, 7
    %v852 = vsub.s32 1, %v851
    %v853 = vrot.slane %v838, %v852
    %v854 = vlaneseq
    %v855 = vshrl.u32 %v854, 7
    %v856 = vsub.s32 0, %v855
    %v857 = vrot.slane %v845, %v856
    %v858 = vlaneseq
    %v859 = vshrl.u32 %v858, 7
    %v860 = vsub.s32 1, %v859
    %v861 = vrot.slane %v845, %v860
    %v866 = vmul.f32 %v431, %v849
    %v867 = vmul.f32 %v432, %v853
    %v868 = vmul.f32 %v433, %v849
    %v869 = vmul.f32 %v434, %v853
    %v870 = vmul.f32 %v435, %v849
    %v871 = vmul.f32 %v436, %v853
    %v872 = vmul.f32 %v437, %v849
    %v873 = vmul.f32 %v438, %v853
    %v874 = vmul.f32 %v439, %v857
    %v875 = vmul.f32 %v440, %v861
    %v876 = vmul.f32 %v441, %v857
    %v877 = vmul.f32 %v442, %v861
    %v878 = vmul.f32 %v443, %v857
    %v879 = vmul.f32 %v444, %v861
    %v880 = vmul.f32 %v445, %v857
    %v881 = vmul.f32 %v446, %v861
    %882 = vst [vmem:[#allocation7] sm:$0xff] %v866
    %883 = vst [vmem:[#allocation7 + $0x8] sm:$0xff] %v867
    %884 = vst [vmem:[#allocation7 + $0x10] sm:$0xff] %v868
    %885 = vst [vmem:[#allocation7 + $0x18] sm:$0xff] %v869
    %886 = vst [vmem:[#allocation7 + $0x20] sm:$0xff] %v870
    %887 = vst [vmem:[#allocation7 + $0x28] sm:$0xff] %v871
    %888 = vst [vmem:[#allocation7 + $0x30] sm:$0xff] %v872
    %889 = vst [vmem:[#allocation7 + $0x38] sm:$0xff] %v873
    %890 = vst [vmem:[#allocation7 + $0x40] sm:$0xff] %v874
    %891 = vst [vmem:[#allocation7 + $0x48] sm:$0xff] %v875
    %892 = vst [vmem:[#allocation7 + $0x50] sm:$0xff] %v876
    %893 = vst [vmem:[#allocation7 + $0x58] sm:$0xff] %v877
    %894 = vst [vmem:[#allocation7 + $0x60] sm:$0xff] %v878
    %895 = vst [vmem:[#allocation7 + $0x68] sm:$0xff] %v879
    %896 = vst [vmem:[#allocation7 + $0x70] sm:$0xff] %v880
    %897 = vst [vmem:[#allocation7 + $0x78] sm:$0xff] %v881
    // Predicated region
    $region26: #{tpu_custom_call.1} parent=1 // pred_check
      _
    $region27: #{tpu_custom_call.1} parent=1 // pred_check_branch
      %899 = sbr.rel (0) target = $region29
    $region28: #{tpu_custom_call.1} parent=1 // pred_region
      %s901 = ssub.s32 2048, 2048
      %902 = vsyncadd [#allocation4], %s901
      %s903 = sshll.u32 [#allocation7], 4
      %s904 = int_to_ptr.vmem [resolvable:$true] %s903
      %909 = dma.vmem_to_hbm [thread:$0]  %s904, 2048, %s4, [#allocation4], 256, 256, 16
    $region29: #{tpu_custom_call.1} parent=1 // pred_fallthru
      _
    // Predicated region
    $region30: #{tpu_custom_call.1} parent=1 // pred_check
      _
    $region31: #{tpu_custom_call.1} parent=1 // pred_check_branch
      %911 = sbr.rel (0) target = $region33
    $region32: #{tpu_custom_call.1} parent=1 // pred_region
      %912 = dma.done [#allocation4], 2048
    $region33: #{tpu_custom_call.1} parent=1 // pred_fallthru
      _
    %913 = vsyncpa [#allocation3], 1
    %914 = vsyncpa [#allocation6], 1
    %915 = vsyncpa [#allocation4], 1

</llo_original>
